<compile_context>
chip_gen: v5e
topology: v5e:2x2
jax: 0.10.0
libtpu: 0.0.40
codegen_flags: <defaults>
</compile_context>

<pallas_src>
import functools

import jax
import jax.numpy as jnp
from jax.experimental import pallas as pl
from jax.experimental.pallas import tpu as pltpu

NUM_CLASSES = 31
IN_FEATURES = 2048
HIDDEN = 256
OUT_PAD = 128  # lane-dense padded fc output width (>= NUM_CLASSES)


def _round_up(x, m):
    return (x + m - 1) // m * m


def classifier_kernel(x_ref, w1_ref, b1_ref, w2_ref, b2_ref, out_ref):
    # x_ref : (TB, 2048) bf16         w1_ref: (2048, 256) bf16
    # b1_ref: (1, 256)   f32          w2_ref: (256, 128)  bf16 (zero-padded)
    # b2_ref: (1, 128)   f32          out_ref: (TB, 128)  f32
    h = jnp.dot(x_ref[...], w1_ref[...],
                preferred_element_type=jnp.float32)          # MXU, f32 acc
    h = jnp.maximum(h + b1_ref[...], 0.0)                    # bias + ReLU (VPU)
    # Dropout(0.5): identity in eval/inference mode.
    # TODO(synk): training-mode dropout would need pltpu.prng_seed /
    #             prng_random_bits masking and 2x scaling.
    o = jnp.dot(h.astype(jnp.bfloat16), w2_ref[...],
                preferred_element_type=jnp.float32)          # MXU, f32 acc
    out_ref[...] = (o + b2_ref[...]).astype(out_ref.dtype)


@jax.jit
def classifier_forward(x, w1, b1, w2, b2):
    """x: [B, ...] flattening to [B, 2048] -> [B, 31]."""
    B = x.shape[0]
    x = x.reshape(B, -1)                                     # x.view(B, -1)
    assert x.shape[1] == IN_FEATURES

    # Batch tile: multiple of 16 (bf16 sublane packing), capped at 512 so the
    # working set (2 double-buffered bf16 x tiles = 4 MiB + ~1.1 MiB resident
    # weights + out buffers) stays well under v7x's 64 MiB VMEM, while still
    # amortizing per-step grid overhead on v5e/v6e.
    TB = min(512, _round_up(B, 16))
    B_pad = _round_up(B, TB)

    x_bf = x.astype(jnp.bfloat16)
    if B_pad != B:
        x_bf = jnp.pad(x_bf, ((0, B_pad - B), (0, 0)))

    w1_bf = w1.astype(jnp.bfloat16)
    w2_pad = jnp.zeros((HIDDEN, OUT_PAD), jnp.bfloat16)
    w2_pad = w2_pad.at[:, :NUM_CLASSES].set(w2.astype(jnp.bfloat16))
    b1_2d = b1.reshape(1, HIDDEN).astype(jnp.float32)
    b2_2d = jnp.zeros((1, OUT_PAD), jnp.float32)
    b2_2d = b2_2d.at[0, :NUM_CLASSES].set(b2.astype(jnp.float32))

    out_padded = pl.pallas_call(
        classifier_kernel,
        out_shape=jax.ShapeDtypeStruct((B_pad, OUT_PAD), jnp.float32),
        grid=(B_pad // TB,),
        in_specs=[
            pl.BlockSpec((TB, IN_FEATURES), lambda i: (i, 0)),   # x tiles
            pl.BlockSpec((IN_FEATURES, HIDDEN), lambda i: (0, 0)),  # W1 resident
            pl.BlockSpec((1, HIDDEN), lambda i: (0, 0)),            # b1 resident
            pl.BlockSpec((HIDDEN, OUT_PAD), lambda i: (0, 0)),      # W2 resident
            pl.BlockSpec((1, OUT_PAD), lambda i: (0, 0)),           # b2 resident
        ],
        out_specs=pl.BlockSpec((TB, OUT_PAD), lambda i: (i, 0)),
        compiler_params=pltpu.CompilerParams(
            dimension_semantics=("parallel",),
            vmem_limit_bytes=32 << 20,
        ),
    )(x_bf, w1_bf, b1_2d, w2_pad, b2_2d)

    return out_padded[:B, :NUM_CLASSES]


def init_params(key):
    """Deterministic init mirroring nn.Linear default (+/- 1/sqrt(fan_in))."""
    k1, k2, k3, k4 = jax.random.split(key, 4)
    bound1 = 1.0 / jnp.sqrt(jnp.float32(IN_FEATURES))
    bound2 = 1.0 / jnp.sqrt(jnp.float32(HIDDEN))
    w1 = jax.random.uniform(k1, (IN_FEATURES, HIDDEN), jnp.float32,
                            -bound1, bound1)
    b1 = jax.random.uniform(k2, (HIDDEN,), jnp.float32, -bound1, bound1)
    w2 = jax.random.uniform(k3, (HIDDEN, NUM_CLASSES), jnp.float32,
                            -bound2, bound2)
    b2 = jax.random.uniform(k4, (NUM_CLASSES,), jnp.float32, -bound2, bound2)
    return w1, b1, w2, b2


if __name__ == "__main__":
    key = jax.random.PRNGKey(0)
    kx, kp = jax.random.split(key)

    B = 4
    # 8*16*16 = 2048 features; exercises the x.view(B, -1) flatten.
    x = jax.random.normal(kx, (B, 8, 16, 16), dtype=jnp.float32)
    w1, b1, w2, b2 = init_params(kp)

    out = jax.block_until_ready(classifier_forward(x, w1, b1, w2, b2))

    # Pure-JAX reference using the same bf16-in / f32-accumulate recipe.
    xf = x.reshape(B, -1)
    h_ref = jnp.maximum(
        jnp.dot(xf.astype(jnp.bfloat16), w1.astype(jnp.bfloat16),
                preferred_element_type=jnp.float32) + b1, 0.0)
    ref = jnp.dot(h_ref.astype(jnp.bfloat16), w2.astype(jnp.bfloat16),
                  preferred_element_type=jnp.float32) + b2

    assert out.shape == (B, NUM_CLASSES)
    assert jnp.allclose(out, ref, atol=1e-2, rtol=1e-2), \
        float(jnp.max(jnp.abs(out - ref)))

    print("KERNEL_OK")
</pallas_src>

<mosaic_0001>
module attributes {stable_mosaic.version = 11 : i64} {
  func.func @classifier_kernel(%arg0: i32, %arg1: memref<16x2048xbf16, #tpu.memory_space<vmem>>, %arg2: memref<2048x256xbf16, #tpu.memory_space<vmem>>, %arg3: memref<1x256xf32, #tpu.memory_space<vmem>>, %arg4: memref<256x128xbf16, #tpu.memory_space<vmem>>, %arg5: memref<1x128xf32, #tpu.memory_space<vmem>>, %arg6: memref<16x128xf32, #tpu.memory_space<vmem>>) attributes {dimension_semantics = [#tpu.dimension_semantics<parallel>], iteration_bounds = array<i64: 1>, scalar_prefetch = 0 : i64, scratch_operands = 0 : i64, tpu.core_type = #tpu.core_type<tc>, window_params = [{transform_indices = @transform_0, window_bounds = array<i64: 16, 2048>}, {pipeline_mode = #tpu.pipeline_mode<synchronous>, transform_indices = @transform_1, window_bounds = array<i64: 2048, 256>}, {pipeline_mode = #tpu.pipeline_mode<synchronous>, transform_indices = @transform_2, window_bounds = array<i64: 1, 256>}, {pipeline_mode = #tpu.pipeline_mode<synchronous>, transform_indices = @transform_3, window_bounds = array<i64: 256, 128>}, {pipeline_mode = #tpu.pipeline_mode<synchronous>, transform_indices = @transform_4, window_bounds = array<i64: 1, 128>}, {transform_indices = @transform_5, window_bounds = array<i64: 16, 128>}]} {
    %c0 = arith.constant 0 : index
    %c0_0 = arith.constant 0 : index
    %0 = vector.load %arg1[%c0, %c0_0] : memref<16x2048xbf16, #tpu.memory_space<vmem>>, vector<16x2048xbf16>
    %c0_1 = arith.constant 0 : index
    %c0_2 = arith.constant 0 : index
    %1 = vector.load %arg2[%c0_1, %c0_2] : memref<2048x256xbf16, #tpu.memory_space<vmem>>, vector<2048x256xbf16>
    %cst = arith.constant dense<0.000000e+00> : vector<16x256xf32>
    %2 = tpu.matmul %0, %1, %cst {dimension_numbers = #tpu.dot_dimension_numbers<[1], [0], [0], [1], [0, 0, 1, 1], [], []>} : vector<16x2048xbf16>, vector<2048x256xbf16>, vector<16x256xf32> -> vector<16x256xf32>
    %c0_3 = arith.constant 0 : index
    %c0_4 = arith.constant 0 : index
    %3 = vector.load %arg3[%c0_3, %c0_4] : memref<1x256xf32, #tpu.memory_space<vmem>>, vector<1x256xf32>
    %4 = vector.broadcast %3 : vector<1x256xf32> to vector<16x256xf32>
    %5 = arith.addf %2, %4 : vector<16x256xf32>
    %cst_5 = arith.constant 0.000000e+00 : f32
    %6 = vector.broadcast %cst_5 : f32 to vector<16x256xf32>
    %7 = arith.maximumf %5, %6 : vector<16x256xf32>
    %8 = arith.truncf %7 : vector<16x256xf32> to vector<16x256xbf16>
    %c0_6 = arith.constant 0 : index
    %c0_7 = arith.constant 0 : index
    %9 = vector.load %arg4[%c0_6, %c0_7] : memref<256x128xbf16, #tpu.memory_space<vmem>>, vector<256x128xbf16>
    %cst_8 = arith.constant dense<0.000000e+00> : vector<16x128xf32>
    %10 = tpu.matmul %8, %9, %cst_8 {dimension_numbers = #tpu.dot_dimension_numbers<[1], [0], [0], [1], [0, 0, 1, 1], [], []>} : vector<16x256xbf16>, vector<256x128xbf16>, vector<16x128xf32> -> vector<16x128xf32>
    %c0_9 = arith.constant 0 : index
    %c0_10 = arith.constant 0 : index
    %11 = vector.load %arg5[%c0_9, %c0_10] : memref<1x128xf32, #tpu.memory_space<vmem>>, vector<1x128xf32>
    %12 = vector.broadcast %11 : vector<1x128xf32> to vector<16x128xf32>
    %13 = arith.addf %10, %12 : vector<16x128xf32>
    %c0_11 = arith.constant 0 : index
    %c0_12 = arith.constant 0 : index
    %14 = vector.load %arg6[%c0_11, %c0_12] : memref<16x128xf32, #tpu.memory_space<vmem>>, vector<16x128xf32>
    tpu.vector_store %arg6[%c0_11, %c0_12], %13 {strides = array<i32>} : memref<16x128xf32, #tpu.memory_space<vmem>>, vector<16x128xf32>,
    return
  }
  func.func @transform_0(%arg0: i32) -> (i32, i32) {
    %c0_i32 = arith.constant 0 : i32
    %c0_i32_0 = arith.constant 0 : i32
    return %arg0, %c0_i32 : i32, i32
  }
  func.func @transform_1(%arg0: i32) -> (i32, i32) {
    %c0_i32 = arith.constant 0 : i32
    %c0_i32_0 = arith.constant 0 : i32
    %c0_i32_1 = arith.constant 0 : i32
    return %c0_i32, %c0_i32_0 : i32, i32
  }
  func.func @transform_2(%arg0: i32) -> (i32, i32) {
    %c0_i32 = arith.constant 0 : i32
    %c0_i32_0 = arith.constant 0 : i32
    %c0_i32_1 = arith.constant 0 : i32
    return %c0_i32, %c0_i32_0 : i32, i32
  }
  func.func @transform_3(%arg0: i32) -> (i32, i32) {
    %c0_i32 = arith.constant 0 : i32
    %c0_i32_0 = arith.constant 0 : i32
    %c0_i32_1 = arith.constant 0 : i32
    return %c0_i32, %c0_i32_0 : i32, i32
  }
  func.func @transform_4(%arg0: i32) -> (i32, i32) {
    %c0_i32 = arith.constant 0 : i32
    %c0_i32_0 = arith.constant 0 : i32
    %c0_i32_1 = arith.constant 0 : i32
    return %c0_i32, %c0_i32_0 : i32, i32
  }
  func.func @transform_5(%arg0: i32) -> (i32, i32) {
    %c0_i32 = arith.constant 0 : i32
    %c0_i32_0 = arith.constant 0 : i32
    return %arg0, %c0_i32 : i32, i32
  }
}

</mosaic_0001>

<llo_original>
// kernel: classifier_forward.1
$region0: #{classifier_forward.1}
  #allocation0 [shape = 'u32[]', space=smem, size = 0x4, offset = 0x4, fixed_abs, tag = 'smem constant byte address 0x4 - core index']
  #allocation1 [shape = 'u32[72,128]{1,0:T(1,128)}', space=vmem, size = 0x9000, scoped, tag = 'internal scratch']
  %s0 = inlined_call_operand.vmem [shape: bf16[16,2048], index: 0, kind: input, shape index: {}]
  %s1 = inlined_call_operand.vmem [shape: bf16[2048,256], index: 1, kind: input, shape index: {}]
  %s2 = inlined_call_operand.vmem [shape: f32[1,256], index: 2, kind: input, shape index: {}]
  %s3 = inlined_call_operand.vmem [shape: bf16[256,128], index: 3, kind: input, shape index: {}]
  %s4 = inlined_call_operand.vmem [shape: f32[1,128], index: 4, kind: input, shape index: {}]
  %s5 = inlined_call_operand.vmem [shape: f32[16,128], index: 5, kind: output, shape index: {}]
  %s6 = sld [smem:[#allocation0]]
  $region30: #{classifier_forward.1} parent=0
    _
  %s8 = ssub.s32 1, %s6
  %s9 = scalar_select 0, %s8, %s6
  // Predicated region
  $region2: #{classifier_forward.1} parent=0 // pred_check
    _
  $region3: #{classifier_forward.1} parent=0 // pred_check_branch
    %11 = sbr.rel (0) target = $region5
  $region4: #{classifier_forward.1} parent=0 // pred_region
    _
  $region5: #{classifier_forward.1} parent=0 // pred_fallthru
    _
  // Predicated region
  $region6: #{classifier_forward.1} parent=0 // pred_check
    _
  $region7: #{classifier_forward.1} parent=0 // pred_check_branch
    %13 = sbr.rel (0) target = $region9
  $region8: #{classifier_forward.1} parent=0 // pred_region
    _
  $region9: #{classifier_forward.1} parent=0 // pred_fallthru
    _
  // Predicated region
  $region10: #{classifier_forward.1} parent=0 // pred_check
    _
  $region11: #{classifier_forward.1} parent=0 // pred_check_branch
    %15 = sbr.rel (0) target = $region13
  $region12: #{classifier_forward.1} parent=0 // pred_region
    _
  $region13: #{classifier_forward.1} parent=0 // pred_fallthru
    _
  // Predicated region
  $region14: #{classifier_forward.1} parent=0 // pred_check
    _
  $region15: #{classifier_forward.1} parent=0 // pred_check_branch
    %17 = sbr.rel (0) target = $region17
  $region16: #{classifier_forward.1} parent=0 // pred_region
    _
  $region17: #{classifier_forward.1} parent=0 // pred_fallthru
    _
  // Predicated region
  $region18: #{classifier_forward.1} parent=0 // pred_check
    _
  $region19: #{classifier_forward.1} parent=0 // pred_check_branch
    %19 = sbr.rel (0) target = $region21
  $region20: #{classifier_forward.1} parent=0 // pred_region
    _
  $region21: #{classifier_forward.1} parent=0 // pred_fallthru
    _
  %v20 = vld [vmem:[%s0] sm:$0xff]
  %v21 = vld [vmem:[%s0 + $0x8] sm:$0xff]
  %v22 = vld [vmem:[%s0 + $0x10] sm:$0xff]
  %v23 = vld [vmem:[%s0 + $0x18] sm:$0xff]
  %v24 = vld [vmem:[%s0 + $0x20] sm:$0xff]
  %v25 = vld [vmem:[%s0 + $0x28] sm:$0xff]
  %v26 = vld [vmem:[%s0 + $0x30] sm:$0xff]
  %v27 = vld [vmem:[%s0 + $0x38] sm:$0xff]
  %v28 = vld [vmem:[%s0 + $0x40] sm:$0xff]
  %v29 = vld [vmem:[%s0 + $0x48] sm:$0xff]
  %v30 = vld [vmem:[%s0 + $0x50] sm:$0xff]
  %v31 = vld [vmem:[%s0 + $0x58] sm:$0xff]
  %v32 = vld [vmem:[%s0 + $0x60] sm:$0xff]
  %v33 = vld [vmem:[%s0 + $0x68] sm:$0xff]
  %v34 = vld [vmem:[%s0 + $0x70] sm:$0xff]
  %v35 = vld [vmem:[%s0 + $0x78] sm:$0xff]
  %v36 = vld [vmem:[%s1] sm:$0xff]
  %v37 = vld [vmem:[%s1 + $0x8] sm:$0xff]
  %v38 = vld [vmem:[%s1 + $0x10] sm:$0xff]
  %v39 = vld [vmem:[%s1 + $0x18] sm:$0xff]
  %v40 = vld [vmem:[%s1 + $0x20] sm:$0xff]
  %v41 = vld [vmem:[%s1 + $0x28] sm:$0xff]
  %v42 = vld [vmem:[%s1 + $0x30] sm:$0xff]
  %v43 = vld [vmem:[%s1 + $0x38] sm:$0xff]
  %v44 = vld [vmem:[%s1 + $0x40] sm:$0xff]
  %v45 = vld [vmem:[%s1 + $0x48] sm:$0xff]
  %v46 = vld [vmem:[%s1 + $0x50] sm:$0xff]
  %v47 = vld [vmem:[%s1 + $0x58] sm:$0xff]
  %v48 = vld [vmem:[%s1 + $0x60] sm:$0xff]
  %v49 = vld [vmem:[%s1 + $0x68] sm:$0xff]
  %v50 = vld [vmem:[%s1 + $0x70] sm:$0xff]
  %v51 = vld [vmem:[%s1 + $0x78] sm:$0xff]
  %v52 = vld [vmem:[%s1 + $0x80] sm:$0xff]
  %v53 = vld [vmem:[%s1 + $0x88] sm:$0xff]
  %v54 = vld [vmem:[%s1 + $0x90] sm:$0xff]
  %v55 = vld [vmem:[%s1 + $0x98] sm:$0xff]
  %v56 = vld [vmem:[%s1 + $0xa0] sm:$0xff]
  %v57 = vld [vmem:[%s1 + $0xa8] sm:$0xff]
  %v58 = vld [vmem:[%s1 + $0xb0] sm:$0xff]
  %v59 = vld [vmem:[%s1 + $0xb8] sm:$0xff]
  %v60 = vld [vmem:[%s1 + $0xc0] sm:$0xff]
  %v61 = vld [vmem:[%s1 + $0xc8] sm:$0xff]
  %v62 = vld [vmem:[%s1 + $0xd0] sm:$0xff]
  %v63 = vld [vmem:[%s1 + $0xd8] sm:$0xff]
  %v64 = vld [vmem:[%s1 + $0xe0] sm:$0xff]
  %v65 = vld [vmem:[%s1 + $0xe8] sm:$0xff]
  %v66 = vld [vmem:[%s1 + $0xf0] sm:$0xff]
  %v67 = vld [vmem:[%s1 + $0xf8] sm:$0xff]
  %v68 = vld [vmem:[%s1 + $0x100] sm:$0xff]
  %v69 = vld [vmem:[%s1 + $0x108] sm:$0xff]
  %v70 = vld [vmem:[%s1 + $0x110] sm:$0xff]
  %v71 = vld [vmem:[%s1 + $0x118] sm:$0xff]
  %v72 = vld [vmem:[%s1 + $0x120] sm:$0xff]
  %v73 = vld [vmem:[%s1 + $0x128] sm:$0xff]
  %v74 = vld [vmem:[%s1 + $0x130] sm:$0xff]
  %v75 = vld [vmem:[%s1 + $0x138] sm:$0xff]
  %v76 = vld [vmem:[%s1 + $0x140] sm:$0xff]
  %v77 = vld [vmem:[%s1 + $0x148] sm:$0xff]
  %v78 = vld [vmem:[%s1 + $0x150] sm:$0xff]
  %v79 = vld [vmem:[%s1 + $0x158] sm:$0xff]
  %v80 = vld [vmem:[%s1 + $0x160] sm:$0xff]
  %v81 = vld [vmem:[%s1 + $0x168] sm:$0xff]
  %v82 = vld [vmem:[%s1 + $0x170] sm:$0xff]
  %v83 = vld [vmem:[%s1 + $0x178] sm:$0xff]
  %v84 = vld [vmem:[%s1 + $0x180] sm:$0xff]
  %v85 = vld [vmem:[%s1 + $0x188] sm:$0xff]
  %v86 = vld [vmem:[%s1 + $0x190] sm:$0xff]
  %v87 = vld [vmem:[%s1 + $0x198] sm:$0xff]
  %v88 = vld [vmem:[%s1 + $0x1a0] sm:$0xff]
  %v89 = vld [vmem:[%s1 + $0x1a8] sm:$0xff]
  %v90 = vld [vmem:[%s1 + $0x1b0] sm:$0xff]
  %v91 = vld [vmem:[%s1 + $0x1b8] sm:$0xff]
  %v92 = vld [vmem:[%s1 + $0x1c0] sm:$0xff]
  %v93 = vld [vmem:[%s1 + $0x1c8] sm:$0xff]
  %v94 = vld [vmem:[%s1 + $0x1d0] sm:$0xff]
  %v95 = vld [vmem:[%s1 + $0x1d8] sm:$0xff]
  %v96 = vld [vmem:[%s1 + $0x1e0] sm:$0xff]
  %v97 = vld [vmem:[%s1 + $0x1e8] sm:$0xff]
  %v98 = vld [vmem:[%s1 + $0x1f0] sm:$0xff]
  %v99 = vld [vmem:[%s1 + $0x1f8] sm:$0xff]
  %v100 = vld [vmem:[%s1 + $0x200] sm:$0xff]
  %v101 = vld [vmem:[%s1 + $0x208] sm:$0xff]
  %v102 = vld [vmem:[%s1 + $0x210] sm:$0xff]
  %v103 = vld [vmem:[%s1 + $0x218] sm:$0xff]
  %v104 = vld [vmem:[%s1 + $0x220] sm:$0xff]
  %v105 = vld [vmem:[%s1 + $0x228] sm:$0xff]
  %v106 = vld [vmem:[%s1 + $0x230] sm:$0xff]
  %v107 = vld [vmem:[%s1 + $0x238] sm:$0xff]
  %v108 = vld [vmem:[%s1 + $0x240] sm:$0xff]
  %v109 = vld [vmem:[%s1 + $0x248] sm:$0xff]
  %v110 = vld [vmem:[%s1 + $0x250] sm:$0xff]
  %v111 = vld [vmem:[%s1 + $0x258] sm:$0xff]
  %v112 = vld [vmem:[%s1 + $0x260] sm:$0xff]
  %v113 = vld [vmem:[%s1 + $0x268] sm:$0xff]
  %v114 = vld [vmem:[%s1 + $0x270] sm:$0xff]
  %v115 = vld [vmem:[%s1 + $0x278] sm:$0xff]
  %v116 = vld [vmem:[%s1 + $0x280] sm:$0xff]
  %v117 = vld [vmem:[%s1 + $0x288] sm:$0xff]
  %v118 = vld [vmem:[%s1 + $0x290] sm:$0xff]
  %v119 = vld [vmem:[%s1 + $0x298] sm:$0xff]
  %v120 = vld [vmem:[%s1 + $0x2a0] sm:$0xff]
  %v121 = vld [vmem:[%s1 + $0x2a8] sm:$0xff]
  %v122 = vld [vmem:[%s1 + $0x2b0] sm:$0xff]
  %v123 = vld [vmem:[%s1 + $0x2b8] sm:$0xff]
  %v124 = vld [vmem:[%s1 + $0x2c0] sm:$0xff]
  %v125 = vld [vmem:[%s1 + $0x2c8] sm:$0xff]
  %v126 = vld [vmem:[%s1 + $0x2d0] sm:$0xff]
  %v127 = vld [vmem:[%s1 + $0x2d8] sm:$0xff]
  %v128 = vld [vmem:[%s1 + $0x2e0] sm:$0xff]
  %v129 = vld [vmem:[%s1 + $0x2e8] sm:$0xff]
  %v130 = vld [vmem:[%s1 + $0x2f0] sm:$0xff]
  %v131 = vld [vmem:[%s1 + $0x2f8] sm:$0xff]
  %v132 = vld [vmem:[%s1 + $0x300] sm:$0xff]
  %v133 = vld [vmem:[%s1 + $0x308] sm:$0xff]
  %v134 = vld [vmem:[%s1 + $0x310] sm:$0xff]
  %v135 = vld [vmem:[%s1 + $0x318] sm:$0xff]
  %v136 = vld [vmem:[%s1 + $0x320] sm:$0xff]
  %v137 = vld [vmem:[%s1 + $0x328] sm:$0xff]
  %v138 = vld [vmem:[%s1 + $0x330] sm:$0xff]
  %v139 = vld [vmem:[%s1 + $0x338] sm:$0xff]
  %v140 = vld [vmem:[%s1 + $0x340] sm:$0xff]
  %v141 = vld [vmem:[%s1 + $0x348] sm:$0xff]
  %v142 = vld [vmem:[%s1 + $0x350] sm:$0xff]
  %v143 = vld [vmem:[%s1 + $0x358] sm:$0xff]
  %v144 = vld [vmem:[%s1 + $0x360] sm:$0xff]
  %v145 = vld [vmem:[%s1 + $0x368] sm:$0xff]
  %v146 = vld [vmem:[%s1 + $0x370] sm:$0xff]
  %v147 = vld [vmem:[%s1 + $0x378] sm:$0xff]
  %v148 = vld [vmem:[%s1 + $0x380] sm:$0xff]
  %v149 = vld [vmem:[%s1 + $0x388] sm:$0xff]
  %v150 = vld [vmem:[%s1 + $0x390] sm:$0xff]
  %v151 = vld [vmem:[%s1 + $0x398] sm:$0xff]
  %v152 = vld [vmem:[%s1 + $0x3a0] sm:$0xff]
  %v153 = vld [vmem:[%s1 + $0x3a8] sm:$0xff]
  %v154 = vld [vmem:[%s1 + $0x3b0] sm:$0xff]
  %v155 = vld [vmem:[%s1 + $0x3b8] sm:$0xff]
  %v156 = vld [vmem:[%s1 + $0x3c0] sm:$0xff]
  %v157 = vld [vmem:[%s1 + $0x3c8] sm:$0xff]
  %v158 = vld [vmem:[%s1 + $0x3d0] sm:$0xff]
  %v159 = vld [vmem:[%s1 + $0x3d8] sm:$0xff]
  %v160 = vld [vmem:[%s1 + $0x3e0] sm:$0xff]
  %v161 = vld [vmem:[%s1 + $0x3e8] sm:$0xff]
  %v162 = vld [vmem:[%s1 + $0x3f0] sm:$0xff]
  %v163 = vld [vmem:[%s1 + $0x3f8] sm:$0xff]
  %v164 = vld [vmem:[%s1 + $0x400] sm:$0xff]
  %v165 = vld [vmem:[%s1 + $0x408] sm:$0xff]
  %v166 = vld [vmem:[%s1 + $0x410] sm:$0xff]
  %v167 = vld [vmem:[%s1 + $0x418] sm:$0xff]
  %v168 = vld [vmem:[%s1 + $0x420] sm:$0xff]
  %v169 = vld [vmem:[%s1 + $0x428] sm:$0xff]
  %v170 = vld [vmem:[%s1 + $0x430] sm:$0xff]
  %v171 = vld [vmem:[%s1 + $0x438] sm:$0xff]
  %v172 = vld [vmem:[%s1 + $0x440] sm:$0xff]
  %v173 = vld [vmem:[%s1 + $0x448] sm:$0xff]
  %v174 = vld [vmem:[%s1 + $0x450] sm:$0xff]
  %v175 = vld [vmem:[%s1 + $0x458] sm:$0xff]
  %v176 = vld [vmem:[%s1 + $0x460] sm:$0xff]
  %v177 = vld [vmem:[%s1 + $0x468] sm:$0xff]
  %v178 = vld [vmem:[%s1 + $0x470] sm:$0xff]
  %v179 = vld [vmem:[%s1 + $0x478] sm:$0xff]
  %v180 = vld [vmem:[%s1 + $0x480] sm:$0xff]
  %v181 = vld [vmem:[%s1 + $0x488] sm:$0xff]
  %v182 = vld [vmem:[%s1 + $0x490] sm:$0xff]
  %v183 = vld [vmem:[%s1 + $0x498] sm:$0xff]
  %v184 = vld [vmem:[%s1 + $0x4a0] sm:$0xff]
  %v185 = vld [vmem:[%s1 + $0x4a8] sm:$0xff]
  %v186 = vld [vmem:[%s1 + $0x4b0] sm:$0xff]
  %v187 = vld [vmem:[%s1 + $0x4b8] sm:$0xff]
  %v188 = vld [vmem:[%s1 + $0x4c0] sm:$0xff]
  %v189 = vld [vmem:[%s1 + $0x4c8] sm:$0xff]
  %v190 = vld [vmem:[%s1 + $0x4d0] sm:$0xff]
  %v191 = vld [vmem:[%s1 + $0x4d8] sm:$0xff]
  %v192 = vld [vmem:[%s1 + $0x4e0] sm:$0xff]
  %v193 = vld [vmem:[%s1 + $0x4e8] sm:$0xff]
  %v194 = vld [vmem:[%s1 + $0x4f0] sm:$0xff]
  %v195 = vld [vmem:[%s1 + $0x4f8] sm:$0xff]
  %v196 = vld [vmem:[%s1 + $0x500] sm:$0xff]
  %v197 = vld [vmem:[%s1 + $0x508] sm:$0xff]
  %v198 = vld [vmem:[%s1 + $0x510] sm:$0xff]
  %v199 = vld [vmem:[%s1 + $0x518] sm:$0xff]
  %v200 = vld [vmem:[%s1 + $0x520] sm:$0xff]
  %v201 = vld [vmem:[%s1 + $0x528] sm:$0xff]
  %v202 = vld [vmem:[%s1 + $0x530] sm:$0xff]
  %v203 = vld [vmem:[%s1 + $0x538] sm:$0xff]
  %v204 = vld [vmem:[%s1 + $0x540] sm:$0xff]
  %v205 = vld [vmem:[%s1 + $0x548] sm:$0xff]
  %v206 = vld [vmem:[%s1 + $0x550] sm:$0xff]
  %v207 = vld [vmem:[%s1 + $0x558] sm:$0xff]
  %v208 = vld [vmem:[%s1 + $0x560] sm:$0xff]
  %v209 = vld [vmem:[%s1 + $0x568] sm:$0xff]
  %v210 = vld [vmem:[%s1 + $0x570] sm:$0xff]
  %v211 = vld [vmem:[%s1 + $0x578] sm:$0xff]
  %v212 = vld [vmem:[%s1 + $0x580] sm:$0xff]
  %v213 = vld [vmem:[%s1 + $0x588] sm:$0xff]
  %v214 = vld [vmem:[%s1 + $0x590] sm:$0xff]
  %v215 = vld [vmem:[%s1 + $0x598] sm:$0xff]
  %v216 = vld [vmem:[%s1 + $0x5a0] sm:$0xff]
  %v217 = vld [vmem:[%s1 + $0x5a8] sm:$0xff]
  %v218 = vld [vmem:[%s1 + $0x5b0] sm:$0xff]
  %v219 = vld [vmem:[%s1 + $0x5b8] sm:$0xff]
  %v220 = vld [vmem:[%s1 + $0x5c0] sm:$0xff]
  %v221 = vld [vmem:[%s1 + $0x5c8] sm:$0xff]
  %v222 = vld [vmem:[%s1 + $0x5d0] sm:$0xff]
  %v223 = vld [vmem:[%s1 + $0x5d8] sm:$0xff]
  %v224 = vld [vmem:[%s1 + $0x5e0] sm:$0xff]
  %v225 = vld [vmem:[%s1 + $0x5e8] sm:$0xff]
  %v226 = vld [vmem:[%s1 + $0x5f0] sm:$0xff]
  %v227 = vld [vmem:[%s1 + $0x5f8] sm:$0xff]
  %v228 = vld [vmem:[%s1 + $0x600] sm:$0xff]
  %v229 = vld [vmem:[%s1 + $0x608] sm:$0xff]
  %v230 = vld [vmem:[%s1 + $0x610] sm:$0xff]
  %v231 = vld [vmem:[%s1 + $0x618] sm:$0xff]
  %v232 = vld [vmem:[%s1 + $0x620] sm:$0xff]
  %v233 = vld [vmem:[%s1 + $0x628] sm:$0xff]
  %v234 = vld [vmem:[%s1 + $0x630] sm:$0xff]
  %v235 = vld [vmem:[%s1 + $0x638] sm:$0xff]
  %v236 = vld [vmem:[%s1 + $0x640] sm:$0xff]
  %v237 = vld [vmem:[%s1 + $0x648] sm:$0xff]
  %v238 = vld [vmem:[%s1 + $0x650] sm:$0xff]
  %v239 = vld [vmem:[%s1 + $0x658] sm:$0xff]
  %v240 = vld [vmem:[%s1 + $0x660] sm:$0xff]
  %v241 = vld [vmem:[%s1 + $0x668] sm:$0xff]
  %v242 = vld [vmem:[%s1 + $0x670] sm:$0xff]
  %v243 = vld [vmem:[%s1 + $0x678] sm:$0xff]
  %v244 = vld [vmem:[%s1 + $0x680] sm:$0xff]
  %v245 = vld [vmem:[%s1 + $0x688] sm:$0xff]
  %v246 = vld [vmem:[%s1 + $0x690] sm:$0xff]
  %v247 = vld [vmem:[%s1 + $0x698] sm:$0xff]
  %v248 = vld [vmem:[%s1 + $0x6a0] sm:$0xff]
  %v249 = vld [vmem:[%s1 + $0x6a8] sm:$0xff]
  %v250 = vld [vmem:[%s1 + $0x6b0] sm:$0xff]
  %v251 = vld [vmem:[%s1 + $0x6b8] sm:$0xff]
  %v252 = vld [vmem:[%s1 + $0x6c0] sm:$0xff]
  %v253 = vld [vmem:[%s1 + $0x6c8] sm:$0xff]
  %v254 = vld [vmem:[%s1 + $0x6d0] sm:$0xff]
  %v255 = vld [vmem:[%s1 + $0x6d8] sm:$0xff]
  %v256 = vld [vmem:[%s1 + $0x6e0] sm:$0xff]
  %v257 = vld [vmem:[%s1 + $0x6e8] sm:$0xff]
  %v258 = vld [vmem:[%s1 + $0x6f0] sm:$0xff]
  %v259 = vld [vmem:[%s1 + $0x6f8] sm:$0xff]
  %v260 = vld [vmem:[%s1 + $0x700] sm:$0xff]
  %v261 = vld [vmem:[%s1 + $0x708] sm:$0xff]
  %v262 = vld [vmem:[%s1 + $0x710] sm:$0xff]
  %v263 = vld [vmem:[%s1 + $0x718] sm:$0xff]
  %v264 = vld [vmem:[%s1 + $0x720] sm:$0xff]
  %v265 = vld [vmem:[%s1 + $0x728] sm:$0xff]
  %v266 = vld [vmem:[%s1 + $0x730] sm:$0xff]
  %v267 = vld [vmem:[%s1 + $0x738] sm:$0xff]
  %v268 = vld [vmem:[%s1 + $0x740] sm:$0xff]
  %v269 = vld [vmem:[%s1 + $0x748] sm:$0xff]
  %v270 = vld [vmem:[%s1 + $0x750] sm:$0xff]
  %v271 = vld [vmem:[%s1 + $0x758] sm:$0xff]
  %v272 = vld [vmem:[%s1 + $0x760] sm:$0xff]
  %v273 = vld [vmem:[%s1 + $0x768] sm:$0xff]
  %v274 = vld [vmem:[%s1 + $0x770] sm:$0xff]
  %v275 = vld [vmem:[%s1 + $0x778] sm:$0xff]
  %v276 = vld [vmem:[%s1 + $0x780] sm:$0xff]
  %v277 = vld [vmem:[%s1 + $0x788] sm:$0xff]
  %v278 = vld [vmem:[%s1 + $0x790] sm:$0xff]
  %v279 = vld [vmem:[%s1 + $0x798] sm:$0xff]
  %v280 = vld [vmem:[%s1 + $0x7a0] sm:$0xff]
  %v281 = vld [vmem:[%s1 + $0x7a8] sm:$0xff]
  %v282 = vld [vmem:[%s1 + $0x7b0] sm:$0xff]
  %v283 = vld [vmem:[%s1 + $0x7b8] sm:$0xff]
  %v284 = vld [vmem:[%s1 + $0x7c0] sm:$0xff]
  %v285 = vld [vmem:[%s1 + $0x7c8] sm:$0xff]
  %v286 = vld [vmem:[%s1 + $0x7d0] sm:$0xff]
  %v287 = vld [vmem:[%s1 + $0x7d8] sm:$0xff]
  %v288 = vld [vmem:[%s1 + $0x7e0] sm:$0xff]
  %v289 = vld [vmem:[%s1 + $0x7e8] sm:$0xff]
  %v290 = vld [vmem:[%s1 + $0x7f0] sm:$0xff]
  %v291 = vld [vmem:[%s1 + $0x7f8] sm:$0xff]
  %v292 = vld [vmem:[%s2] sm:$0x3]
  %v294 = vperm.slane %v292, 0
  %v295 = vperm.slane %v292, 1
  %v314 = vunpack.c.l.b16 %v20
  %v315 = vunpack.c.h.b16 %v20
  %v316 = vunpack.c.l.b16 %v21
  %v317 = vunpack.c.h.b16 %v21
  %v318 = vunpack.c.l.b16 %v22
  %v319 = vunpack.c.h.b16 %v22
  %v320 = vunpack.c.l.b16 %v23
  %v321 = vunpack.c.h.b16 %v23
  %v322 = vunpack.c.l.b16 %v24
  %v323 = vunpack.c.h.b16 %v24
  %v324 = vunpack.c.l.b16 %v25
  %v325 = vunpack.c.h.b16 %v25
  %v326 = vunpack.c.l.b16 %v26
  %v327 = vunpack.c.h.b16 %v26
  %v328 = vunpack.c.l.b16 %v27
  %v329 = vunpack.c.h.b16 %v27
  %v330 = vunpack.c.l.b16 %v28
  %v331 = vunpack.c.h.b16 %v28
  %v332 = vunpack.c.l.b16 %v29
  %v333 = vunpack.c.h.b16 %v29
  %v334 = vunpack.c.l.b16 %v30
  %v335 = vunpack.c.h.b16 %v30
  %v336 = vunpack.c.l.b16 %v31
  %v337 = vunpack.c.h.b16 %v31
  %v338 = vunpack.c.l.b16 %v32
  %v339 = vunpack.c.h.b16 %v32
  %v340 = vunpack.c.l.b16 %v33
  %v341 = vunpack.c.h.b16 %v33
  %v342 = vunpack.c.l.b16 %v34
  %v343 = vunpack.c.h.b16 %v34
  %v344 = vunpack.c.l.b16 %v35
  %v345 = vunpack.c.h.b16 %v35
  %v346 = vpack.c.b16 %v330, %v314
  %v347 = vpack.c.b16 %v331, %v315
  %v348 = vpack.c.b16 %v332, %v316
  %v349 = vpack.c.b16 %v333, %v317
  %v350 = vpack.c.b16 %v334, %v318
  %v351 = vpack.c.b16 %v335, %v319
  %v352 = vpack.c.b16 %v336, %v320
  %v353 = vpack.c.b16 %v337, %v321
  %v354 = vpack.c.b16 %v338, %v322
  %v355 = vpack.c.b16 %v339, %v323
  %v356 = vpack.c.b16 %v340, %v324
  %v357 = vpack.c.b16 %v341, %v325
  %v358 = vpack.c.b16 %v342, %v326
  %v359 = vpack.c.b16 %v343, %v327
  %v360 = vpack.c.b16 %v344, %v328
  %v361 = vpack.c.b16 %v345, %v329
  %v634 = vunpack.c.l.b16 %v36
  %v635 = vunpack.c.h.b16 %v36
  %v636 = vunpack.c.l.b16 %v37
  %v637 = vunpack.c.h.b16 %v37
  %v638 = vunpack.c.l.b16 %v38
  %v639 = vunpack.c.h.b16 %v38
  %v640 = vunpack.c.l.b16 %v39
  %v641 = vunpack.c.h.b16 %v39
  %v642 = vunpack.c.l.b16 %v40
  %v643 = vunpack.c.h.b16 %v40
  %v644 = vunpack.c.l.b16 %v41
  %v645 = vunpack.c.h.b16 %v41
  %v646 = vunpack.c.l.b16 %v42
  %v647 = vunpack.c.h.b16 %v42
  %v648 = vunpack.c.l.b16 %v43
  %v649 = vunpack.c.h.b16 %v43
  %v650 = vunpack.c.l.b16 %v44
  %v651 = vunpack.c.h.b16 %v44
  %v652 = vunpack.c.l.b16 %v45
  %v653 = vunpack.c.h.b16 %v45
  %v654 = vunpack.c.l.b16 %v46
  %v655 = vunpack.c.h.b16 %v46
  %v656 = vunpack.c.l.b16 %v47
  %v657 = vunpack.c.h.b16 %v47
  %v658 = vunpack.c.l.b16 %v48
  %v659 = vunpack.c.h.b16 %v48
  %v660 = vunpack.c.l.b16 %v49
  %v661 = vunpack.c.h.b16 %v49
  %v662 = vunpack.c.l.b16 %v50
  %v663 = vunpack.c.h.b16 %v50
  %v664 = vunpack.c.l.b16 %v51
  %v665 = vunpack.c.h.b16 %v51
  %v666 = vunpack.c.l.b16 %v52
  %v667 = vunpack.c.h.b16 %v52
  %v668 = vunpack.c.l.b16 %v53
  %v669 = vunpack.c.h.b16 %v53
  %v670 = vunpack.c.l.b16 %v54
  %v671 = vunpack.c.h.b16 %v54
  %v672 = vunpack.c.l.b16 %v55
  %v673 = vunpack.c.h.b16 %v55
  %v674 = vunpack.c.l.b16 %v56
  %v675 = vunpack.c.h.b16 %v56
  %v676 = vunpack.c.l.b16 %v57
  %v677 = vunpack.c.h.b16 %v57
  %v678 = vunpack.c.l.b16 %v58
  %v679 = vunpack.c.h.b16 %v58
  %v680 = vunpack.c.l.b16 %v59
  %v681 = vunpack.c.h.b16 %v59
  %v682 = vunpack.c.l.b16 %v60
  %v683 = vunpack.c.h.b16 %v60
  %v684 = vunpack.c.l.b16 %v61
  %v685 = vunpack.c.h.b16 %v61
  %v686 = vunpack.c.l.b16 %v62
  %v687 = vunpack.c.h.b16 %v62
  %v688 = vunpack.c.l.b16 %v63
  %v689 = vunpack.c.h.b16 %v63
  %v690 = vunpack.c.l.b16 %v64
  %v691 = vunpack.c.h.b16 %v64
  %v692 = vunpack.c.l.b16 %v65
  %v693 = vunpack.c.h.b16 %v65
  %v694 = vunpack.c.l.b16 %v66
  %v695 = vunpack.c.h.b16 %v66
  %v696 = vunpack.c.l.b16 %v67
  %v697 = vunpack.c.h.b16 %v67
  %v698 = vunpack.c.l.b16 %v68
  %v699 = vunpack.c.h.b16 %v68
  %v700 = vunpack.c.l.b16 %v69
  %v701 = vunpack.c.h.b16 %v69
  %v702 = vunpack.c.l.b16 %v70
  %v703 = vunpack.c.h.b16 %v70
  %v704 = vunpack.c.l.b16 %v71
  %v705 = vunpack.c.h.b16 %v71
  %v706 = vunpack.c.l.b16 %v72
  %v707 = vunpack.c.h.b16 %v72
  %v708 = vunpack.c.l.b16 %v73
  %v709 = vunpack.c.h.b16 %v73
  %v710 = vunpack.c.l.b16 %v74
  %v711 = vunpack.c.h.b16 %v74
  %v712 = vunpack.c.l.b16 %v75
  %v713 = vunpack.c.h.b16 %v75
  %v714 = vunpack.c.l.b16 %v76
  %v715 = vunpack.c.h.b16 %v76
  %v716 = vunpack.c.l.b16 %v77
  %v717 = vunpack.c.h.b16 %v77
  %v718 = vunpack.c.l.b16 %v78
  %v719 = vunpack.c.h.b16 %v78
  %v720 = vunpack.c.l.b16 %v79
  %v721 = vunpack.c.h.b16 %v79
  %v722 = vunpack.c.l.b16 %v80
  %v723 = vunpack.c.h.b16 %v80
  %v724 = vunpack.c.l.b16 %v81
  %v725 = vunpack.c.h.b16 %v81
  %v726 = vunpack.c.l.b16 %v82
  %v727 = vunpack.c.h.b16 %v82
  %v728 = vunpack.c.l.b16 %v83
  %v729 = vunpack.c.h.b16 %v83
  %v730 = vunpack.c.l.b16 %v84
  %v731 = vunpack.c.h.b16 %v84
  %v732 = vunpack.c.l.b16 %v85
  %v733 = vunpack.c.h.b16 %v85
  %v734 = vunpack.c.l.b16 %v86
  %v735 = vunpack.c.h.b16 %v86
  %v736 = vunpack.c.l.b16 %v87
  %v737 = vunpack.c.h.b16 %v87
  %v738 = vunpack.c.l.b16 %v88
  %v739 = vunpack.c.h.b16 %v88
  %v740 = vunpack.c.l.b16 %v89
  %v741 = vunpack.c.h.b16 %v89
  %v742 = vunpack.c.l.b16 %v90
  %v743 = vunpack.c.h.b16 %v90
  %v744 = vunpack.c.l.b16 %v91
  %v745 = vunpack.c.h.b16 %v91
  %v746 = vunpack.c.l.b16 %v92
  %v747 = vunpack.c.h.b16 %v92
  %v748 = vunpack.c.l.b16 %v93
  %v749 = vunpack.c.h.b16 %v93
  %v750 = vunpack.c.l.b16 %v94
  %v751 = vunpack.c.h.b16 %v94
  %v752 = vunpack.c.l.b16 %v95
  %v753 = vunpack.c.h.b16 %v95
  %v754 = vunpack.c.l.b16 %v96
  %v755 = vunpack.c.h.b16 %v96
  %v756 = vunpack.c.l.b16 %v97
  %v757 = vunpack.c.h.b16 %v97
  %v758 = vunpack.c.l.b16 %v98
  %v759 = vunpack.c.h.b16 %v98
  %v760 = vunpack.c.l.b16 %v99
  %v761 = vunpack.c.h.b16 %v99
  %v762 = vunpack.c.l.b16 %v100
  %v763 = vunpack.c.h.b16 %v100
  %v764 = vunpack.c.l.b16 %v101
  %v765 = vunpack.c.h.b16 %v101
  %v766 = vunpack.c.l.b16 %v102
  %v767 = vunpack.c.h.b16 %v102
  %v768 = vunpack.c.l.b16 %v103
  %v769 = vunpack.c.h.b16 %v103
  %v770 = vunpack.c.l.b16 %v104
  %v771 = vunpack.c.h.b16 %v104
  %v772 = vunpack.c.l.b16 %v105
  %v773 = vunpack.c.h.b16 %v105
  %v774 = vunpack.c.l.b16 %v106
  %v775 = vunpack.c.h.b16 %v106
  %v776 = vunpack.c.l.b16 %v107
  %v777 = vunpack.c.h.b16 %v107
  %v778 = vunpack.c.l.b16 %v108
  %v779 = vunpack.c.h.b16 %v108
  %v780 = vunpack.c.l.b16 %v109
  %v781 = vunpack.c.h.b16 %v109
  %v782 = vunpack.c.l.b16 %v110
  %v783 = vunpack.c.h.b16 %v110
  %v784 = vunpack.c.l.b16 %v111
  %v785 = vunpack.c.h.b16 %v111
  %v786 = vunpack.c.l.b16 %v112
  %v787 = vunpack.c.h.b16 %v112
  %v788 = vunpack.c.l.b16 %v113
  %v789 = vunpack.c.h.b16 %v113
  %v790 = vunpack.c.l.b16 %v114
  %v791 = vunpack.c.h.b16 %v114
  %v792 = vunpack.c.l.b16 %v115
  %v793 = vunpack.c.h.b16 %v115
  %v794 = vunpack.c.l.b16 %v116
  %v795 = vunpack.c.h.b16 %v116
  %v796 = vunpack.c.l.b16 %v117
  %v797 = vunpack.c.h.b16 %v117
  %v798 = vunpack.c.l.b16 %v118
  %v799 = vunpack.c.h.b16 %v118
  %v800 = vunpack.c.l.b16 %v119
  %v801 = vunpack.c.h.b16 %v119
  %v802 = vunpack.c.l.b16 %v120
  %v803 = vunpack.c.h.b16 %v120
  %v804 = vunpack.c.l.b16 %v121
  %v805 = vunpack.c.h.b16 %v121
  %v806 = vunpack.c.l.b16 %v122
  %v807 = vunpack.c.h.b16 %v122
  %v808 = vunpack.c.l.b16 %v123
  %v809 = vunpack.c.h.b16 %v123
  %v810 = vunpack.c.l.b16 %v124
  %v811 = vunpack.c.h.b16 %v124
  %v812 = vunpack.c.l.b16 %v125
  %v813 = vunpack.c.h.b16 %v125
  %v814 = vunpack.c.l.b16 %v126
  %v815 = vunpack.c.h.b16 %v126
  %v816 = vunpack.c.l.b16 %v127
  %v817 = vunpack.c.h.b16 %v127
  %v818 = vunpack.c.l.b16 %v128
  %v819 = vunpack.c.h.b16 %v128
  %v820 = vunpack.c.l.b16 %v129
  %v821 = vunpack.c.h.b16 %v129
  %v822 = vunpack.c.l.b16 %v130
  %v823 = vunpack.c.h.b16 %v130
  %v824 = vunpack.c.l.b16 %v131
  %v825 = vunpack.c.h.b16 %v131
  %v826 = vunpack.c.l.b16 %v132
  %v827 = vunpack.c.h.b16 %v132
  %v828 = vunpack.c.l.b16 %v133
  %v829 = vunpack.c.h.b16 %v133
  %v830 = vunpack.c.l.b16 %v134
  %v831 = vunpack.c.h.b16 %v134
  %v832 = vunpack.c.l.b16 %v135
  %v833 = vunpack.c.h.b16 %v135
  %v834 = vunpack.c.l.b16 %v136
  %v835 = vunpack.c.h.b16 %v136
  %v836 = vunpack.c.l.b16 %v137
  %v837 = vunpack.c.h.b16 %v137
  %v838 = vunpack.c.l.b16 %v138
  %v839 = vunpack.c.h.b16 %v138
  %v840 = vunpack.c.l.b16 %v139
  %v841 = vunpack.c.h.b16 %v139
  %v842 = vunpack.c.l.b16 %v140
  %v843 = vunpack.c.h.b16 %v140
  %v844 = vunpack.c.l.b16 %v141
  %v845 = vunpack.c.h.b16 %v141
  %v846 = vunpack.c.l.b16 %v142
  %v847 = vunpack.c.h.b16 %v142
  %v848 = vunpack.c.l.b16 %v143
  %v849 = vunpack.c.h.b16 %v143
  %v850 = vunpack.c.l.b16 %v144
  %v851 = vunpack.c.h.b16 %v144
  %v852 = vunpack.c.l.b16 %v145
  %v853 = vunpack.c.h.b16 %v145
  %v854 = vunpack.c.l.b16 %v146
  %v855 = vunpack.c.h.b16 %v146
  %v856 = vunpack.c.l.b16 %v147
  %v857 = vunpack.c.h.b16 %v147
  %v858 = vunpack.c.l.b16 %v148
  %v859 = vunpack.c.h.b16 %v148
  %v860 = vunpack.c.l.b16 %v149
  %v861 = vunpack.c.h.b16 %v149
  %v862 = vunpack.c.l.b16 %v150
  %v863 = vunpack.c.h.b16 %v150
  %v864 = vunpack.c.l.b16 %v151
  %v865 = vunpack.c.h.b16 %v151
  %v866 = vunpack.c.l.b16 %v152
  %v867 = vunpack.c.h.b16 %v152
  %v868 = vunpack.c.l.b16 %v153
  %v869 = vunpack.c.h.b16 %v153
  %v870 = vunpack.c.l.b16 %v154
  %v871 = vunpack.c.h.b16 %v154
  %v872 = vunpack.c.l.b16 %v155
  %v873 = vunpack.c.h.b16 %v155
  %v874 = vunpack.c.l.b16 %v156
  %v875 = vunpack.c.h.b16 %v156
  %v876 = vunpack.c.l.b16 %v157
  %v877 = vunpack.c.h.b16 %v157
  %v878 = vunpack.c.l.b16 %v158
  %v879 = vunpack.c.h.b16 %v158
  %v880 = vunpack.c.l.b16 %v159
  %v881 = vunpack.c.h.b16 %v159
  %v882 = vunpack.c.l.b16 %v160
  %v883 = vunpack.c.h.b16 %v160
  %v884 = vunpack.c.l.b16 %v161
  %v885 = vunpack.c.h.b16 %v161
  %v886 = vunpack.c.l.b16 %v162
  %v887 = vunpack.c.h.b16 %v162
  %v888 = vunpack.c.l.b16 %v163
  %v889 = vunpack.c.h.b16 %v163
  %v890 = vunpack.c.l.b16 %v164
  %v891 = vunpack.c.h.b16 %v164
  %v892 = vunpack.c.l.b16 %v165
  %v893 = vunpack.c.h.b16 %v165
  %v894 = vunpack.c.l.b16 %v166
  %v895 = vunpack.c.h.b16 %v166
  %v896 = vunpack.c.l.b16 %v167
  %v897 = vunpack.c.h.b16 %v167
  %v898 = vunpack.c.l.b16 %v168
  %v899 = vunpack.c.h.b16 %v168
  %v900 = vunpack.c.l.b16 %v169
  %v901 = vunpack.c.h.b16 %v169
  %v902 = vunpack.c.l.b16 %v170
  %v903 = vunpack.c.h.b16 %v170
  %v904 = vunpack.c.l.b16 %v171
  %v905 = vunpack.c.h.b16 %v171
  %v906 = vunpack.c.l.b16 %v172
  %v907 = vunpack.c.h.b16 %v172
  %v908 = vunpack.c.l.b16 %v173
  %v909 = vunpack.c.h.b16 %v173
  %v910 = vunpack.c.l.b16 %v174
  %v911 = vunpack.c.h.b16 %v174
  %v912 = vunpack.c.l.b16 %v175
  %v913 = vunpack.c.h.b16 %v175
  %v914 = vunpack.c.l.b16 %v176
  %v915 = vunpack.c.h.b16 %v176
  %v916 = vunpack.c.l.b16 %v177
  %v917 = vunpack.c.h.b16 %v177
  %v918 = vunpack.c.l.b16 %v178
  %v919 = vunpack.c.h.b16 %v178
  %v920 = vunpack.c.l.b16 %v179
  %v921 = vunpack.c.h.b16 %v179
  %v922 = vunpack.c.l.b16 %v180
  %v923 = vunpack.c.h.b16 %v180
  %v924 = vunpack.c.l.b16 %v181
  %v925 = vunpack.c.h.b16 %v181
  %v926 = vunpack.c.l.b16 %v182
  %v927 = vunpack.c.h.b16 %v182
  %v928 = vunpack.c.l.b16 %v183
  %v929 = vunpack.c.h.b16 %v183
  %v930 = vunpack.c.l.b16 %v184
  %v931 = vunpack.c.h.b16 %v184
  %v932 = vunpack.c.l.b16 %v185
  %v933 = vunpack.c.h.b16 %v185
  %v934 = vunpack.c.l.b16 %v186
  %v935 = vunpack.c.h.b16 %v186
  %v936 = vunpack.c.l.b16 %v187
  %v937 = vunpack.c.h.b16 %v187
  %v938 = vunpack.c.l.b16 %v188
  %v939 = vunpack.c.h.b16 %v188
  %v940 = vunpack.c.l.b16 %v189
  %v941 = vunpack.c.h.b16 %v189
  %v942 = vunpack.c.l.b16 %v190
  %v943 = vunpack.c.h.b16 %v190
  %v944 = vunpack.c.l.b16 %v191
  %v945 = vunpack.c.h.b16 %v191
  %v946 = vunpack.c.l.b16 %v192
  %v947 = vunpack.c.h.b16 %v192
  %v948 = vunpack.c.l.b16 %v193
  %v949 = vunpack.c.h.b16 %v193
  %v950 = vunpack.c.l.b16 %v194
  %v951 = vunpack.c.h.b16 %v194
  %v952 = vunpack.c.l.b16 %v195
  %v953 = vunpack.c.h.b16 %v195
  %v954 = vunpack.c.l.b16 %v196
  %v955 = vunpack.c.h.b16 %v196
  %v956 = vunpack.c.l.b16 %v197
  %v957 = vunpack.c.h.b16 %v197
  %v958 = vunpack.c.l.b16 %v198
  %v959 = vunpack.c.h.b16 %v198
  %v960 = vunpack.c.l.b16 %v199
  %v961 = vunpack.c.h.b16 %v199
  %v962 = vunpack.c.l.b16 %v200
  %v963 = vunpack.c.h.b16 %v200
  %v964 = vunpack.c.l.b16 %v201
  %v965 = vunpack.c.h.b16 %v201
  %v966 = vunpack.c.l.b16 %v202
  %v967 = vunpack.c.h.b16 %v202
  %v968 = vunpack.c.l.b16 %v203
  %v969 = vunpack.c.h.b16 %v203
  %v970 = vunpack.c.l.b16 %v204
  %v971 = vunpack.c.h.b16 %v204
  %v972 = vunpack.c.l.b16 %v205
  %v973 = vunpack.c.h.b16 %v205
  %v974 = vunpack.c.l.b16 %v206
  %v975 = vunpack.c.h.b16 %v206
  %v976 = vunpack.c.l.b16 %v207
  %v977 = vunpack.c.h.b16 %v207
  %v978 = vunpack.c.l.b16 %v208
  %v979 = vunpack.c.h.b16 %v208
  %v980 = vunpack.c.l.b16 %v209
  %v981 = vunpack.c.h.b16 %v209
  %v982 = vunpack.c.l.b16 %v210
  %v983 = vunpack.c.h.b16 %v210
  %v984 = vunpack.c.l.b16 %v211
  %v985 = vunpack.c.h.b16 %v211
  %v986 = vunpack.c.l.b16 %v212
  %v987 = vunpack.c.h.b16 %v212
  %v988 = vunpack.c.l.b16 %v213
  %v989 = vunpack.c.h.b16 %v213
  %v990 = vunpack.c.l.b16 %v214
  %v991 = vunpack.c.h.b16 %v214
  %v992 = vunpack.c.l.b16 %v215
  %v993 = vunpack.c.h.b16 %v215
  %v994 = vunpack.c.l.b16 %v216
  %v995 = vunpack.c.h.b16 %v216
  %v996 = vunpack.c.l.b16 %v217
  %v997 = vunpack.c.h.b16 %v217
  %v998 = vunpack.c.l.b16 %v218
  %v999 = vunpack.c.h.b16 %v218
  %v1000 = vunpack.c.l.b16 %v219
  %v1001 = vunpack.c.h.b16 %v219
  %v1002 = vunpack.c.l.b16 %v220
  %v1003 = vunpack.c.h.b16 %v220
  %v1004 = vunpack.c.l.b16 %v221
  %v1005 = vunpack.c.h.b16 %v221
  %v1006 = vunpack.c.l.b16 %v222
  %v1007 = vunpack.c.h.b16 %v222
  %v1008 = vunpack.c.l.b16 %v223
  %v1009 = vunpack.c.h.b16 %v223
  %v1010 = vunpack.c.l.b16 %v224
  %v1011 = vunpack.c.h.b16 %v224
  %v1012 = vunpack.c.l.b16 %v225
  %v1013 = vunpack.c.h.b16 %v225
  %v1014 = vunpack.c.l.b16 %v226
  %v1015 = vunpack.c.h.b16 %v226
  %v1016 = vunpack.c.l.b16 %v227
  %v1017 = vunpack.c.h.b16 %v227
  %v1018 = vunpack.c.l.b16 %v228
  %v1019 = vunpack.c.h.b16 %v228
  %v1020 = vunpack.c.l.b16 %v229
  %v1021 = vunpack.c.h.b16 %v229
  %v1022 = vunpack.c.l.b16 %v230
  %v1023 = vunpack.c.h.b16 %v230
  %v1024 = vunpack.c.l.b16 %v231
  %v1025 = vunpack.c.h.b16 %v231
  %v1026 = vunpack.c.l.b16 %v232
  %v1027 = vunpack.c.h.b16 %v232
  %v1028 = vunpack.c.l.b16 %v233
  %v1029 = vunpack.c.h.b16 %v233
  %v1030 = vunpack.c.l.b16 %v234
  %v1031 = vunpack.c.h.b16 %v234
  %v1032 = vunpack.c.l.b16 %v235
  %v1033 = vunpack.c.h.b16 %v235
  %v1034 = vunpack.c.l.b16 %v236
  %v1035 = vunpack.c.h.b16 %v236
  %v1036 = vunpack.c.l.b16 %v237
  %v1037 = vunpack.c.h.b16 %v237
  %v1038 = vunpack.c.l.b16 %v238
  %v1039 = vunpack.c.h.b16 %v238
  %v1040 = vunpack.c.l.b16 %v239
  %v1041 = vunpack.c.h.b16 %v239
  %v1042 = vunpack.c.l.b16 %v240
  %v1043 = vunpack.c.h.b16 %v240
  %v1044 = vunpack.c.l.b16 %v241
  %v1045 = vunpack.c.h.b16 %v241
  %v1046 = vunpack.c.l.b16 %v242
  %v1047 = vunpack.c.h.b16 %v242
  %v1048 = vunpack.c.l.b16 %v243
  %v1049 = vunpack.c.h.b16 %v243
  %v1050 = vunpack.c.l.b16 %v244
  %v1051 = vunpack.c.h.b16 %v244
  %v1052 = vunpack.c.l.b16 %v245
  %v1053 = vunpack.c.h.b16 %v245
  %v1054 = vunpack.c.l.b16 %v246
  %v1055 = vunpack.c.h.b16 %v246
  %v1056 = vunpack.c.l.b16 %v247
  %v1057 = vunpack.c.h.b16 %v247
  %v1058 = vunpack.c.l.b16 %v248
  %v1059 = vunpack.c.h.b16 %v248
  %v1060 = vunpack.c.l.b16 %v249
  %v1061 = vunpack.c.h.b16 %v249
  %v1062 = vunpack.c.l.b16 %v250
  %v1063 = vunpack.c.h.b16 %v250
  %v1064 = vunpack.c.l.b16 %v251
  %v1065 = vunpack.c.h.b16 %v251
  %v1066 = vunpack.c.l.b16 %v252
  %v1067 = vunpack.c.h.b16 %v252
  %v1068 = vunpack.c.l.b16 %v253
  %v1069 = vunpack.c.h.b16 %v253
  %v1070 = vunpack.c.l.b16 %v254
  %v1071 = vunpack.c.h.b16 %v254
  %v1072 = vunpack.c.l.b16 %v255
  %v1073 = vunpack.c.h.b16 %v255
  %v1074 = vunpack.c.l.b16 %v256
  %v1075 = vunpack.c.h.b16 %v256
  %v1076 = vunpack.c.l.b16 %v257
  %v1077 = vunpack.c.h.b16 %v257
  %v1078 = vunpack.c.l.b16 %v258
  %v1079 = vunpack.c.h.b16 %v258
  %v1080 = vunpack.c.l.b16 %v259
  %v1081 = vunpack.c.h.b16 %v259
  %v1082 = vunpack.c.l.b16 %v260
  %v1083 = vunpack.c.h.b16 %v260
  %v1084 = vunpack.c.l.b16 %v261
  %v1085 = vunpack.c.h.b16 %v261
  %v1086 = vunpack.c.l.b16 %v262
  %v1087 = vunpack.c.h.b16 %v262
  %v1088 = vunpack.c.l.b16 %v263
  %v1089 = vunpack.c.h.b16 %v263
  %v1090 = vunpack.c.l.b16 %v264
  %v1091 = vunpack.c.h.b16 %v264
  %v1092 = vunpack.c.l.b16 %v265
  %v1093 = vunpack.c.h.b16 %v265
  %v1094 = vunpack.c.l.b16 %v266
  %v1095 = vunpack.c.h.b16 %v266
  %v1096 = vunpack.c.l.b16 %v267
  %v1097 = vunpack.c.h.b16 %v267
  %v1098 = vunpack.c.l.b16 %v268
  %v1099 = vunpack.c.h.b16 %v268
  %v1100 = vunpack.c.l.b16 %v269
  %v1101 = vunpack.c.h.b16 %v269
  %v1102 = vunpack.c.l.b16 %v270
  %v1103 = vunpack.c.h.b16 %v270
  %v1104 = vunpack.c.l.b16 %v271
  %v1105 = vunpack.c.h.b16 %v271
  %v1106 = vunpack.c.l.b16 %v272
  %v1107 = vunpack.c.h.b16 %v272
  %v1108 = vunpack.c.l.b16 %v273
  %v1109 = vunpack.c.h.b16 %v273
  %v1110 = vunpack.c.l.b16 %v274
  %v1111 = vunpack.c.h.b16 %v274
  %v1112 = vunpack.c.l.b16 %v275
  %v1113 = vunpack.c.h.b16 %v275
  %v1114 = vunpack.c.l.b16 %v276
  %v1115 = vunpack.c.h.b16 %v276
  %v1116 = vunpack.c.l.b16 %v277
  %v1117 = vunpack.c.h.b16 %v277
  %v1118 = vunpack.c.l.b16 %v278
  %v1119 = vunpack.c.h.b16 %v278
  %v1120 = vunpack.c.l.b16 %v279
  %v1121 = vunpack.c.h.b16 %v279
  %v1122 = vunpack.c.l.b16 %v280
  %v1123 = vunpack.c.h.b16 %v280
  %v1124 = vunpack.c.l.b16 %v281
  %v1125 = vunpack.c.h.b16 %v281
  %v1126 = vunpack.c.l.b16 %v282
  %v1127 = vunpack.c.h.b16 %v282
  %v1128 = vunpack.c.l.b16 %v283
  %v1129 = vunpack.c.h.b16 %v283
  %v1130 = vunpack.c.l.b16 %v284
  %v1131 = vunpack.c.h.b16 %v284
  %v1132 = vunpack.c.l.b16 %v285
  %v1133 = vunpack.c.h.b16 %v285
  %v1134 = vunpack.c.l.b16 %v286
  %v1135 = vunpack.c.h.b16 %v286
  %v1136 = vunpack.c.l.b16 %v287
  %v1137 = vunpack.c.h.b16 %v287
  %v1138 = vunpack.c.l.b16 %v288
  %v1139 = vunpack.c.h.b16 %v288
  %v1140 = vunpack.c.l.b16 %v289
  %v1141 = vunpack.c.h.b16 %v289
  %v1142 = vunpack.c.l.b16 %v290
  %v1143 = vunpack.c.h.b16 %v290
  %v1144 = vunpack.c.l.b16 %v291
  %v1145 = vunpack.c.h.b16 %v291
  %v1146 = vpack.c.b16 %v636, %v634
  %v1147 = vpack.c.b16 %v637, %v635
  %v1148 = vpack.c.b16 %v640, %v638
  %v1149 = vpack.c.b16 %v641, %v639
  %v1150 = vpack.c.b16 %v644, %v642
  %v1151 = vpack.c.b16 %v645, %v643
  %v1152 = vpack.c.b16 %v648, %v646
  %v1153 = vpack.c.b16 %v649, %v647
  %v1154 = vpack.c.b16 %v652, %v650
  %v1155 = vpack.c.b16 %v653, %v651
  %v1156 = vpack.c.b16 %v656, %v654
  %v1157 = vpack.c.b16 %v657, %v655
  %v1158 = vpack.c.b16 %v660, %v658
  %v1159 = vpack.c.b16 %v661, %v659
  %v1160 = vpack.c.b16 %v664, %v662
  %v1161 = vpack.c.b16 %v665, %v663
  %v1162 = vpack.c.b16 %v668, %v666
  %v1163 = vpack.c.b16 %v669, %v667
  %v1164 = vpack.c.b16 %v672, %v670
  %v1165 = vpack.c.b16 %v673, %v671
  %v1166 = vpack.c.b16 %v676, %v674
  %v1167 = vpack.c.b16 %v677, %v675
  %v1168 = vpack.c.b16 %v680, %v678
  %v1169 = vpack.c.b16 %v681, %v679
  %v1170 = vpack.c.b16 %v684, %v682
  %v1171 = vpack.c.b16 %v685, %v683
  %v1172 = vpack.c.b16 %v688, %v686
  %v1173 = vpack.c.b16 %v689, %v687
  %v1174 = vpack.c.b16 %v692, %v690
  %v1175 = vpack.c.b16 %v693, %v691
  %v1176 = vpack.c.b16 %v696, %v694
  %v1177 = vpack.c.b16 %v697, %v695
  %v1178 = vpack.c.b16 %v700, %v698
  %v1179 = vpack.c.b16 %v701, %v699
  %v1180 = vpack.c.b16 %v704, %v702
  %v1181 = vpack.c.b16 %v705, %v703
  %v1182 = vpack.c.b16 %v708, %v706
  %v1183 = vpack.c.b16 %v709, %v707
  %v1184 = vpack.c.b16 %v712, %v710
  %v1185 = vpack.c.b16 %v713, %v711
  %v1186 = vpack.c.b16 %v716, %v714
  %v1187 = vpack.c.b16 %v717, %v715
  %v1188 = vpack.c.b16 %v720, %v718
  %v1189 = vpack.c.b16 %v721, %v719
  %v1190 = vpack.c.b16 %v724, %v722
  %v1191 = vpack.c.b16 %v725, %v723
  %v1192 = vpack.c.b16 %v728, %v726
  %v1193 = vpack.c.b16 %v729, %v727
  %v1194 = vpack.c.b16 %v732, %v730
  %v1195 = vpack.c.b16 %v733, %v731
  %v1196 = vpack.c.b16 %v736, %v734
  %v1197 = vpack.c.b16 %v737, %v735
  %v1198 = vpack.c.b16 %v740, %v738
  %v1199 = vpack.c.b16 %v741, %v739
  %v1200 = vpack.c.b16 %v744, %v742
  %v1201 = vpack.c.b16 %v745, %v743
  %v1202 = vpack.c.b16 %v748, %v746
  %v1203 = vpack.c.b16 %v749, %v747
  %v1204 = vpack.c.b16 %v752, %v750
  %v1205 = vpack.c.b16 %v753, %v751
  %v1206 = vpack.c.b16 %v756, %v754
  %v1207 = vpack.c.b16 %v757, %v755
  %v1208 = vpack.c.b16 %v760, %v758
  %v1209 = vpack.c.b16 %v761, %v759
  %v1210 = vpack.c.b16 %v764, %v762
  %v1211 = vpack.c.b16 %v765, %v763
  %v1212 = vpack.c.b16 %v768, %v766
  %v1213 = vpack.c.b16 %v769, %v767
  %v1214 = vpack.c.b16 %v772, %v770
  %v1215 = vpack.c.b16 %v773, %v771
  %v1216 = vpack.c.b16 %v776, %v774
  %v1217 = vpack.c.b16 %v777, %v775
  %v1218 = vpack.c.b16 %v780, %v778
  %v1219 = vpack.c.b16 %v781, %v779
  %v1220 = vpack.c.b16 %v784, %v782
  %v1221 = vpack.c.b16 %v785, %v783
  %v1222 = vpack.c.b16 %v788, %v786
  %v1223 = vpack.c.b16 %v789, %v787
  %v1224 = vpack.c.b16 %v792, %v790
  %v1225 = vpack.c.b16 %v793, %v791
  %v1226 = vpack.c.b16 %v796, %v794
  %v1227 = vpack.c.b16 %v797, %v795
  %v1228 = vpack.c.b16 %v800, %v798
  %v1229 = vpack.c.b16 %v801, %v799
  %v1230 = vpack.c.b16 %v804, %v802
  %v1231 = vpack.c.b16 %v805, %v803
  %v1232 = vpack.c.b16 %v808, %v806
  %v1233 = vpack.c.b16 %v809, %v807
  %v1234 = vpack.c.b16 %v812, %v810
  %v1235 = vpack.c.b16 %v813, %v811
  %v1236 = vpack.c.b16 %v816, %v814
  %v1237 = vpack.c.b16 %v817, %v815
  %v1238 = vpack.c.b16 %v820, %v818
  %v1239 = vpack.c.b16 %v821, %v819
  %v1240 = vpack.c.b16 %v824, %v822
  %v1241 = vpack.c.b16 %v825, %v823
  %v1242 = vpack.c.b16 %v828, %v826
  %v1243 = vpack.c.b16 %v829, %v827
  %v1244 = vpack.c.b16 %v832, %v830
  %v1245 = vpack.c.b16 %v833, %v831
  %v1246 = vpack.c.b16 %v836, %v834
  %v1247 = vpack.c.b16 %v837, %v835
  %v1248 = vpack.c.b16 %v840, %v838
  %v1249 = vpack.c.b16 %v841, %v839
  %v1250 = vpack.c.b16 %v844, %v842
  %v1251 = vpack.c.b16 %v845, %v843
  %v1252 = vpack.c.b16 %v848, %v846
  %v1253 = vpack.c.b16 %v849, %v847
  %v1254 = vpack.c.b16 %v852, %v850
  %v1255 = vpack.c.b16 %v853, %v851
  %v1256 = vpack.c.b16 %v856, %v854
  %v1257 = vpack.c.b16 %v857, %v855
  %v1258 = vpack.c.b16 %v860, %v858
  %v1259 = vpack.c.b16 %v861, %v859
  %v1260 = vpack.c.b16 %v864, %v862
  %v1261 = vpack.c.b16 %v865, %v863
  %v1262 = vpack.c.b16 %v868, %v866
  %v1263 = vpack.c.b16 %v869, %v867
  %v1264 = vpack.c.b16 %v872, %v870
  %v1265 = vpack.c.b16 %v873, %v871
  %v1266 = vpack.c.b16 %v876, %v874
  %v1267 = vpack.c.b16 %v877, %v875
  %v1268 = vpack.c.b16 %v880, %v878
  %v1269 = vpack.c.b16 %v881, %v879
  %v1270 = vpack.c.b16 %v884, %v882
  %v1271 = vpack.c.b16 %v885, %v883
  %v1272 = vpack.c.b16 %v888, %v886
  %v1273 = vpack.c.b16 %v889, %v887
  %v1274 = vpack.c.b16 %v892, %v890
  %v1275 = vpack.c.b16 %v893, %v891
  %v1276 = vpack.c.b16 %v896, %v894
  %v1277 = vpack.c.b16 %v897, %v895
  %v1278 = vpack.c.b16 %v900, %v898
  %v1279 = vpack.c.b16 %v901, %v899
  %v1280 = vpack.c.b16 %v904, %v902
  %v1281 = vpack.c.b16 %v905, %v903
  %v1282 = vpack.c.b16 %v908, %v906
  %v1283 = vpack.c.b16 %v909, %v907
  %v1284 = vpack.c.b16 %v912, %v910
  %v1285 = vpack.c.b16 %v913, %v911
  %v1286 = vpack.c.b16 %v916, %v914
  %v1287 = vpack.c.b16 %v917, %v915
  %v1288 = vpack.c.b16 %v920, %v918
  %v1289 = vpack.c.b16 %v921, %v919
  %v1290 = vpack.c.b16 %v924, %v922
  %v1291 = vpack.c.b16 %v925, %v923
  %v1292 = vpack.c.b16 %v928, %v926
  %v1293 = vpack.c.b16 %v929, %v927
  %v1294 = vpack.c.b16 %v932, %v930
  %v1295 = vpack.c.b16 %v933, %v931
  %v1296 = vpack.c.b16 %v936, %v934
  %v1297 = vpack.c.b16 %v937, %v935
  %v1298 = vpack.c.b16 %v940, %v938
  %v1299 = vpack.c.b16 %v941, %v939
  %v1300 = vpack.c.b16 %v944, %v942
  %v1301 = vpack.c.b16 %v945, %v943
  %v1302 = vpack.c.b16 %v948, %v946
  %v1303 = vpack.c.b16 %v949, %v947
  %v1304 = vpack.c.b16 %v952, %v950
  %v1305 = vpack.c.b16 %v953, %v951
  %v1306 = vpack.c.b16 %v956, %v954
  %v1307 = vpack.c.b16 %v957, %v955
  %v1308 = vpack.c.b16 %v960, %v958
  %v1309 = vpack.c.b16 %v961, %v959
  %v1310 = vpack.c.b16 %v964, %v962
  %v1311 = vpack.c.b16 %v965, %v963
  %v1312 = vpack.c.b16 %v968, %v966
  %v1313 = vpack.c.b16 %v969, %v967
  %v1314 = vpack.c.b16 %v972, %v970
  %v1315 = vpack.c.b16 %v973, %v971
  %v1316 = vpack.c.b16 %v976, %v974
  %v1317 = vpack.c.b16 %v977, %v975
  %v1318 = vpack.c.b16 %v980, %v978
  %v1319 = vpack.c.b16 %v981, %v979
  %v1320 = vpack.c.b16 %v984, %v982
  %v1321 = vpack.c.b16 %v985, %v983
  %v1322 = vpack.c.b16 %v988, %v986
  %v1323 = vpack.c.b16 %v989, %v987
  %v1324 = vpack.c.b16 %v992, %v990
  %v1325 = vpack.c.b16 %v993, %v991
  %v1326 = vpack.c.b16 %v996, %v994
  %v1327 = vpack.c.b16 %v997, %v995
  %v1328 = vpack.c.b16 %v1000, %v998
  %v1329 = vpack.c.b16 %v1001, %v999
  %v1330 = vpack.c.b16 %v1004, %v1002
  %v1331 = vpack.c.b16 %v1005, %v1003
  %v1332 = vpack.c.b16 %v1008, %v1006
  %v1333 = vpack.c.b16 %v1009, %v1007
  %v1334 = vpack.c.b16 %v1012, %v1010
  %v1335 = vpack.c.b16 %v1013, %v1011
  %v1336 = vpack.c.b16 %v1016, %v1014
  %v1337 = vpack.c.b16 %v1017, %v1015
  %v1338 = vpack.c.b16 %v1020, %v1018
  %v1339 = vpack.c.b16 %v1021, %v1019
  %v1340 = vpack.c.b16 %v1024, %v1022
  %v1341 = vpack.c.b16 %v1025, %v1023
  %v1342 = vpack.c.b16 %v1028, %v1026
  %v1343 = vpack.c.b16 %v1029, %v1027
  %v1344 = vpack.c.b16 %v1032, %v1030
  %v1345 = vpack.c.b16 %v1033, %v1031
  %v1346 = vpack.c.b16 %v1036, %v1034
  %v1347 = vpack.c.b16 %v1037, %v1035
  %v1348 = vpack.c.b16 %v1040, %v1038
  %v1349 = vpack.c.b16 %v1041, %v1039
  %v1350 = vpack.c.b16 %v1044, %v1042
  %v1351 = vpack.c.b16 %v1045, %v1043
  %v1352 = vpack.c.b16 %v1048, %v1046
  %v1353 = vpack.c.b16 %v1049, %v1047
  %v1354 = vpack.c.b16 %v1052, %v1050
  %v1355 = vpack.c.b16 %v1053, %v1051
  %v1356 = vpack.c.b16 %v1056, %v1054
  %v1357 = vpack.c.b16 %v1057, %v1055
  %v1358 = vpack.c.b16 %v1060, %v1058
  %v1359 = vpack.c.b16 %v1061, %v1059
  %v1360 = vpack.c.b16 %v1064, %v1062
  %v1361 = vpack.c.b16 %v1065, %v1063
  %v1362 = vpack.c.b16 %v1068, %v1066
  %v1363 = vpack.c.b16 %v1069, %v1067
  %v1364 = vpack.c.b16 %v1072, %v1070
  %v1365 = vpack.c.b16 %v1073, %v1071
  %v1366 = vpack.c.b16 %v1076, %v1074
  %v1367 = vpack.c.b16 %v1077, %v1075
  %v1368 = vpack.c.b16 %v1080, %v1078
  %v1369 = vpack.c.b16 %v1081, %v1079
  %v1370 = vpack.c.b16 %v1084, %v1082
  %v1371 = vpack.c.b16 %v1085, %v1083
  %v1372 = vpack.c.b16 %v1088, %v1086
  %v1373 = vpack.c.b16 %v1089, %v1087
  %v1374 = vpack.c.b16 %v1092, %v1090
  %v1375 = vpack.c.b16 %v1093, %v1091
  %v1376 = vpack.c.b16 %v1096, %v1094
  %v1377 = vpack.c.b16 %v1097, %v1095
  %v1378 = vpack.c.b16 %v1100, %v1098
  %v1379 = vpack.c.b16 %v1101, %v1099
  %v1380 = vpack.c.b16 %v1104, %v1102
  %v1381 = vpack.c.b16 %v1105, %v1103
  %v1382 = vpack.c.b16 %v1108, %v1106
  %v1383 = vpack.c.b16 %v1109, %v1107
  %v1384 = vpack.c.b16 %v1112, %v1110
  %v1385 = vpack.c.b16 %v1113, %v1111
  %v1386 = vpack.c.b16 %v1116, %v1114
  %v1387 = vpack.c.b16 %v1117, %v1115
  %v1388 = vpack.c.b16 %v1120, %v1118
  %v1389 = vpack.c.b16 %v1121, %v1119
  %v1390 = vpack.c.b16 %v1124, %v1122
  %v1391 = vpack.c.b16 %v1125, %v1123
  %v1392 = vpack.c.b16 %v1128, %v1126
  %v1393 = vpack.c.b16 %v1129, %v1127
  %v1394 = vpack.c.b16 %v1132, %v1130
  %v1395 = vpack.c.b16 %v1133, %v1131
  %v1396 = vpack.c.b16 %v1136, %v1134
  %v1397 = vpack.c.b16 %v1137, %v1135
  %v1398 = vpack.c.b16 %v1140, %v1138
  %v1399 = vpack.c.b16 %v1141, %v1139
  %v1400 = vpack.c.b16 %v1144, %v1142
  %v1401 = vpack.c.b16 %v1145, %v1143
  %1658 = vmatpush.bf16.msra.mxu0 %v1160
  %1659 = vmatpush.bf16.msra.mxu0 %v1158
  %1660 = vmatpush.bf16.msra.mxu0 %v1156
  %1661 = vmatpush.bf16.msra.mxu0 %v1154
  %1662 = vmatpush.bf16.msra.mxu0 %v1152
  %1663 = vmatpush.bf16.msra.mxu0 %v1150
  %1664 = vmatpush.bf16.msra.mxu0 %v1148
  %1665 = vmatpush.bf16.msra.mxu0 %v1146
  %1666 = vmatmul.bf16.gmra.mxu0 %v346
  %v1667 = vpop.f32.mrf.mxu0
  %v1668 = vadd.f32 %v294, %v1667
  %v1669 = vpop.f32.mrf.mxu0
  %v1670 = vadd.f32 %v294, %v1669
  %1671 = vdwg.mxu0
  %1672 = vmatpush.bf16.msra.mxu0 %v1176
  %1673 = vmatpush.bf16.msra.mxu0 %v1174
  %1674 = vmatpush.bf16.msra.mxu0 %v1172
  %1675 = vmatpush.bf16.msra.mxu0 %v1170
  %1676 = vmatpush.bf16.msra.mxu0 %v1168
  %1677 = vmatpush.bf16.msra.mxu0 %v1166
  %1678 = vmatpush.bf16.msra.mxu0 %v1164
  %1679 = vmatpush.bf16.msra.mxu0 %v1162
  %1680 = vmatmul.bf16.gmra.mxu0 %v347
  %v1681 = vpop.f32.mrf.mxu0
  %v1682 = vadd.f32 %v1668, %v1681
  %v1683 = vpop.f32.mrf.mxu0
  %v1684 = vadd.f32 %v1670, %v1683
  %1685 = vdwg.mxu0
  %1686 = vmatpush.bf16.msra.mxu0 %v1192
  %1687 = vmatpush.bf16.msra.mxu0 %v1190
  %1688 = vmatpush.bf16.msra.mxu0 %v1188
  %1689 = vmatpush.bf16.msra.mxu0 %v1186
  %1690 = vmatpush.bf16.msra.mxu0 %v1184
  %1691 = vmatpush.bf16.msra.mxu0 %v1182
  %1692 = vmatpush.bf16.msra.mxu0 %v1180
  %1693 = vmatpush.bf16.msra.mxu0 %v1178
  %1694 = vmatmul.bf16.gmra.mxu0 %v348
  %v1695 = vpop.f32.mrf.mxu0
  %v1696 = vadd.f32 %v1682, %v1695
  %v1697 = vpop.f32.mrf.mxu0
  %v1698 = vadd.f32 %v1684, %v1697
  %1699 = vdwg.mxu0
  %1700 = vmatpush.bf16.msra.mxu0 %v1208
  %1701 = vmatpush.bf16.msra.mxu0 %v1206
  %1702 = vmatpush.bf16.msra.mxu0 %v1204
  %1703 = vmatpush.bf16.msra.mxu0 %v1202
  %1704 = vmatpush.bf16.msra.mxu0 %v1200
  %1705 = vmatpush.bf16.msra.mxu0 %v1198
  %1706 = vmatpush.bf16.msra.mxu0 %v1196
  %1707 = vmatpush.bf16.msra.mxu0 %v1194
  %1708 = vmatmul.bf16.gmra.mxu0 %v349
  %v1709 = vpop.f32.mrf.mxu0
  %v1710 = vadd.f32 %v1696, %v1709
  %v1711 = vpop.f32.mrf.mxu0
  %v1712 = vadd.f32 %v1698, %v1711
  %1713 = vdwg.mxu0
  %1714 = vmatpush.bf16.msra.mxu0 %v1224
  %1715 = vmatpush.bf16.msra.mxu0 %v1222
  %1716 = vmatpush.bf16.msra.mxu0 %v1220
  %1717 = vmatpush.bf16.msra.mxu0 %v1218
  %1718 = vmatpush.bf16.msra.mxu0 %v1216
  %1719 = vmatpush.bf16.msra.mxu0 %v1214
  %1720 = vmatpush.bf16.msra.mxu0 %v1212
  %1721 = vmatpush.bf16.msra.mxu0 %v1210
  %1722 = vmatmul.bf16.gmra.mxu0 %v350
  %v1723 = vpop.f32.mrf.mxu0
  %v1724 = vadd.f32 %v1710, %v1723
  %v1725 = vpop.f32.mrf.mxu0
  %v1726 = vadd.f32 %v1712, %v1725
  %1727 = vdwg.mxu0
  %1728 = vmatpush.bf16.msra.mxu0 %v1240
  %1729 = vmatpush.bf16.msra.mxu0 %v1238
  %1730 = vmatpush.bf16.msra.mxu0 %v1236
  %1731 = vmatpush.bf16.msra.mxu0 %v1234
  %1732 = vmatpush.bf16.msra.mxu0 %v1232
  %1733 = vmatpush.bf16.msra.mxu0 %v1230
  %1734 = vmatpush.bf16.msra.mxu0 %v1228
  %1735 = vmatpush.bf16.msra.mxu0 %v1226
  %1736 = vmatmul.bf16.gmra.mxu0 %v351
  %v1737 = vpop.f32.mrf.mxu0
  %v1738 = vadd.f32 %v1724, %v1737
  %v1739 = vpop.f32.mrf.mxu0
  %v1740 = vadd.f32 %v1726, %v1739
  %1741 = vdwg.mxu0
  %1742 = vmatpush.bf16.msra.mxu0 %v1256
  %1743 = vmatpush.bf16.msra.mxu0 %v1254
  %1744 = vmatpush.bf16.msra.mxu0 %v1252
  %1745 = vmatpush.bf16.msra.mxu0 %v1250
  %1746 = vmatpush.bf16.msra.mxu0 %v1248
  %1747 = vmatpush.bf16.msra.mxu0 %v1246
  %1748 = vmatpush.bf16.msra.mxu0 %v1244
  %1749 = vmatpush.bf16.msra.mxu0 %v1242
  %1750 = vmatmul.bf16.gmra.mxu0 %v352
  %v1751 = vpop.f32.mrf.mxu0
  %v1752 = vadd.f32 %v1738, %v1751
  %v1753 = vpop.f32.mrf.mxu0
  %v1754 = vadd.f32 %v1740, %v1753
  %1755 = vdwg.mxu0
  %1756 = vmatpush.bf16.msra.mxu0 %v1272
  %1757 = vmatpush.bf16.msra.mxu0 %v1270
  %1758 = vmatpush.bf16.msra.mxu0 %v1268
  %1759 = vmatpush.bf16.msra.mxu0 %v1266
  %1760 = vmatpush.bf16.msra.mxu0 %v1264
  %1761 = vmatpush.bf16.msra.mxu0 %v1262
  %1762 = vmatpush.bf16.msra.mxu0 %v1260
  %1763 = vmatpush.bf16.msra.mxu0 %v1258
  %1764 = vmatmul.bf16.gmra.mxu0 %v353
  %v1765 = vpop.f32.mrf.mxu0
  %v1766 = vadd.f32 %v1752, %v1765
  %v1767 = vpop.f32.mrf.mxu0
  %v1768 = vadd.f32 %v1754, %v1767
  %1769 = vdwg.mxu0
  %1770 = vmatpush.bf16.msra.mxu0 %v1288
  %1771 = vmatpush.bf16.msra.mxu0 %v1286
  %1772 = vmatpush.bf16.msra.mxu0 %v1284
  %1773 = vmatpush.bf16.msra.mxu0 %v1282
  %1774 = vmatpush.bf16.msra.mxu0 %v1280
  %1775 = vmatpush.bf16.msra.mxu0 %v1278
  %1776 = vmatpush.bf16.msra.mxu0 %v1276
  %1777 = vmatpush.bf16.msra.mxu0 %v1274
  %1778 = vmatmul.bf16.gmra.mxu0 %v354
  %v1779 = vpop.f32.mrf.mxu0
  %v1780 = vadd.f32 %v1766, %v1779
  %v1781 = vpop.f32.mrf.mxu0
  %v1782 = vadd.f32 %v1768, %v1781
  %1783 = vdwg.mxu0
  %1784 = vmatpush.bf16.msra.mxu0 %v1304
  %1785 = vmatpush.bf16.msra.mxu0 %v1302
  %1786 = vmatpush.bf16.msra.mxu0 %v1300
  %1787 = vmatpush.bf16.msra.mxu0 %v1298
  %1788 = vmatpush.bf16.msra.mxu0 %v1296
  %1789 = vmatpush.bf16.msra.mxu0 %v1294
  %1790 = vmatpush.bf16.msra.mxu0 %v1292
  %1791 = vmatpush.bf16.msra.mxu0 %v1290
  %1792 = vmatmul.bf16.gmra.mxu0 %v355
  %v1793 = vpop.f32.mrf.mxu0
  %v1794 = vadd.f32 %v1780, %v1793
  %v1795 = vpop.f32.mrf.mxu0
  %v1796 = vadd.f32 %v1782, %v1795
  %1797 = vdwg.mxu0
  %1798 = vmatpush.bf16.msra.mxu0 %v1320
  %1799 = vmatpush.bf16.msra.mxu0 %v1318
  %1800 = vmatpush.bf16.msra.mxu0 %v1316
  %1801 = vmatpush.bf16.msra.mxu0 %v1314
  %1802 = vmatpush.bf16.msra.mxu0 %v1312
  %1803 = vmatpush.bf16.msra.mxu0 %v1310
  %1804 = vmatpush.bf16.msra.mxu0 %v1308
  %1805 = vmatpush.bf16.msra.mxu0 %v1306
  %1806 = vmatmul.bf16.gmra.mxu0 %v356
  %v1807 = vpop.f32.mrf.mxu0
  %v1808 = vadd.f32 %v1794, %v1807
  %v1809 = vpop.f32.mrf.mxu0
  %v1810 = vadd.f32 %v1796, %v1809
  %1811 = vdwg.mxu0
  %1812 = vmatpush.bf16.msra.mxu0 %v1336
  %1813 = vmatpush.bf16.msra.mxu0 %v1334
  %1814 = vmatpush.bf16.msra.mxu0 %v1332
  %1815 = vmatpush.bf16.msra.mxu0 %v1330
  %1816 = vmatpush.bf16.msra.mxu0 %v1328
  %1817 = vmatpush.bf16.msra.mxu0 %v1326
  %1818 = vmatpush.bf16.msra.mxu0 %v1324
  %1819 = vmatpush.bf16.msra.mxu0 %v1322
  %1820 = vmatmul.bf16.gmra.mxu0 %v357
  %v1821 = vpop.f32.mrf.mxu0
  %v1822 = vadd.f32 %v1808, %v1821
  %v1823 = vpop.f32.mrf.mxu0
  %v1824 = vadd.f32 %v1810, %v1823
  %1825 = vdwg.mxu0
  %1826 = vmatpush.bf16.msra.mxu0 %v1352
  %1827 = vmatpush.bf16.msra.mxu0 %v1350
  %1828 = vmatpush.bf16.msra.mxu0 %v1348
  %1829 = vmatpush.bf16.msra.mxu0 %v1346
  %1830 = vmatpush.bf16.msra.mxu0 %v1344
  %1831 = vmatpush.bf16.msra.mxu0 %v1342
  %1832 = vmatpush.bf16.msra.mxu0 %v1340
  %1833 = vmatpush.bf16.msra.mxu0 %v1338
  %1834 = vmatmul.bf16.gmra.mxu0 %v358
  %v1835 = vpop.f32.mrf.mxu0
  %v1836 = vadd.f32 %v1822, %v1835
  %v1837 = vpop.f32.mrf.mxu0
  %v1838 = vadd.f32 %v1824, %v1837
  %1839 = vdwg.mxu0
  %1840 = vmatpush.bf16.msra.mxu0 %v1368
  %1841 = vmatpush.bf16.msra.mxu0 %v1366
  %1842 = vmatpush.bf16.msra.mxu0 %v1364
  %1843 = vmatpush.bf16.msra.mxu0 %v1362
  %1844 = vmatpush.bf16.msra.mxu0 %v1360
  %1845 = vmatpush.bf16.msra.mxu0 %v1358
  %1846 = vmatpush.bf16.msra.mxu0 %v1356
  %1847 = vmatpush.bf16.msra.mxu0 %v1354
  %1848 = vmatmul.bf16.gmra.mxu0 %v359
  %v1849 = vpop.f32.mrf.mxu0
  %v1850 = vadd.f32 %v1836, %v1849
  %v1851 = vpop.f32.mrf.mxu0
  %v1852 = vadd.f32 %v1838, %v1851
  %1853 = vdwg.mxu0
  %1854 = vmatpush.bf16.msra.mxu0 %v1384
  %1855 = vmatpush.bf16.msra.mxu0 %v1382
  %1856 = vmatpush.bf16.msra.mxu0 %v1380
  %1857 = vmatpush.bf16.msra.mxu0 %v1378
  %1858 = vmatpush.bf16.msra.mxu0 %v1376
  %1859 = vmatpush.bf16.msra.mxu0 %v1374
  %1860 = vmatpush.bf16.msra.mxu0 %v1372
  %1861 = vmatpush.bf16.msra.mxu0 %v1370
  %1862 = vmatmul.bf16.gmra.mxu0 %v360
  %v1863 = vpop.f32.mrf.mxu0
  %v1864 = vadd.f32 %v1850, %v1863
  %v1865 = vpop.f32.mrf.mxu0
  %v1866 = vadd.f32 %v1852, %v1865
  %1867 = vdwg.mxu0
  %1868 = vmatpush.bf16.msra.mxu0 %v1400
  %1869 = vmatpush.bf16.msra.mxu0 %v1398
  %1870 = vmatpush.bf16.msra.mxu0 %v1396
  %1871 = vmatpush.bf16.msra.mxu0 %v1394
  %1872 = vmatpush.bf16.msra.mxu0 %v1392
  %1873 = vmatpush.bf16.msra.mxu0 %v1390
  %1874 = vmatpush.bf16.msra.mxu0 %v1388
  %1875 = vmatpush.bf16.msra.mxu0 %v1386
  %1876 = vmatmul.bf16.gmra.mxu0 %v361
  %v1877 = vpop.f32.mrf.mxu0
  %v1878 = vadd.f32 %v1864, %v1877
  %v1879 = vpop.f32.mrf.mxu0
  %v1880 = vadd.f32 %v1866, %v1879
  %1881 = vdwg.mxu0
  %1882 = vmatpush.bf16.msra.mxu0 %v1161
  %1883 = vmatpush.bf16.msra.mxu0 %v1159
  %1884 = vmatpush.bf16.msra.mxu0 %v1157
  %1885 = vmatpush.bf16.msra.mxu0 %v1155
  %1886 = vmatpush.bf16.msra.mxu0 %v1153
  %1887 = vmatpush.bf16.msra.mxu0 %v1151
  %1888 = vmatpush.bf16.msra.mxu0 %v1149
  %1889 = vmatpush.bf16.msra.mxu0 %v1147
  %1890 = vmatmul.bf16.gmra.mxu0 %v346
  %v1891 = vpop.f32.mrf.mxu0
  %v1892 = vadd.f32 %v295, %v1891
  %v1893 = vpop.f32.mrf.mxu0
  %v1894 = vadd.f32 %v295, %v1893
  %1895 = vdwg.mxu0
  %1896 = vmatpush.bf16.msra.mxu0 %v1177
  %1897 = vmatpush.bf16.msra.mxu0 %v1175
  %1898 = vmatpush.bf16.msra.mxu0 %v1173
  %1899 = vmatpush.bf16.msra.mxu0 %v1171
  %1900 = vmatpush.bf16.msra.mxu0 %v1169
  %1901 = vmatpush.bf16.msra.mxu0 %v1167
  %1902 = vmatpush.bf16.msra.mxu0 %v1165
  %1903 = vmatpush.bf16.msra.mxu0 %v1163
  %1904 = vmatmul.bf16.gmra.mxu0 %v347
  %v1905 = vpop.f32.mrf.mxu0
  %v1906 = vadd.f32 %v1892, %v1905
  %v1907 = vpop.f32.mrf.mxu0
  %v1908 = vadd.f32 %v1894, %v1907
  %1909 = vdwg.mxu0
  %1910 = vmatpush.bf16.msra.mxu0 %v1193
  %1911 = vmatpush.bf16.msra.mxu0 %v1191
  %1912 = vmatpush.bf16.msra.mxu0 %v1189
  %1913 = vmatpush.bf16.msra.mxu0 %v1187
  %1914 = vmatpush.bf16.msra.mxu0 %v1185
  %1915 = vmatpush.bf16.msra.mxu0 %v1183
  %1916 = vmatpush.bf16.msra.mxu0 %v1181
  %1917 = vmatpush.bf16.msra.mxu0 %v1179
  %1918 = vmatmul.bf16.gmra.mxu0 %v348
  %v1919 = vpop.f32.mrf.mxu0
  %v1920 = vadd.f32 %v1906, %v1919
  %v1921 = vpop.f32.mrf.mxu0
  %v1922 = vadd.f32 %v1908, %v1921
  %1923 = vdwg.mxu0
  %1924 = vmatpush.bf16.msra.mxu0 %v1209
  %1925 = vmatpush.bf16.msra.mxu0 %v1207
  %1926 = vmatpush.bf16.msra.mxu0 %v1205
  %1927 = vmatpush.bf16.msra.mxu0 %v1203
  %1928 = vmatpush.bf16.msra.mxu0 %v1201
  %1929 = vmatpush.bf16.msra.mxu0 %v1199
  %1930 = vmatpush.bf16.msra.mxu0 %v1197
  %1931 = vmatpush.bf16.msra.mxu0 %v1195
  %1932 = vmatmul.bf16.gmra.mxu0 %v349
  %v1933 = vpop.f32.mrf.mxu0
  %v1934 = vadd.f32 %v1920, %v1933
  %v1935 = vpop.f32.mrf.mxu0
  %v1936 = vadd.f32 %v1922, %v1935
  %1937 = vdwg.mxu0
  %1938 = vmatpush.bf16.msra.mxu0 %v1225
  %1939 = vmatpush.bf16.msra.mxu0 %v1223
  %1940 = vmatpush.bf16.msra.mxu0 %v1221
  %1941 = vmatpush.bf16.msra.mxu0 %v1219
  %1942 = vmatpush.bf16.msra.mxu0 %v1217
  %1943 = vmatpush.bf16.msra.mxu0 %v1215
  %1944 = vmatpush.bf16.msra.mxu0 %v1213
  %1945 = vmatpush.bf16.msra.mxu0 %v1211
  %1946 = vmatmul.bf16.gmra.mxu0 %v350
  %v1947 = vpop.f32.mrf.mxu0
  %v1948 = vadd.f32 %v1934, %v1947
  %v1949 = vpop.f32.mrf.mxu0
  %v1950 = vadd.f32 %v1936, %v1949
  %1951 = vdwg.mxu0
  %1952 = vmatpush.bf16.msra.mxu0 %v1241
  %1953 = vmatpush.bf16.msra.mxu0 %v1239
  %1954 = vmatpush.bf16.msra.mxu0 %v1237
  %1955 = vmatpush.bf16.msra.mxu0 %v1235
  %1956 = vmatpush.bf16.msra.mxu0 %v1233
  %1957 = vmatpush.bf16.msra.mxu0 %v1231
  %1958 = vmatpush.bf16.msra.mxu0 %v1229
  %1959 = vmatpush.bf16.msra.mxu0 %v1227
  %1960 = vmatmul.bf16.gmra.mxu0 %v351
  %v1961 = vpop.f32.mrf.mxu0
  %v1962 = vadd.f32 %v1948, %v1961
  %v1963 = vpop.f32.mrf.mxu0
  %v1964 = vadd.f32 %v1950, %v1963
  %1965 = vdwg.mxu0
  %1966 = vmatpush.bf16.msra.mxu0 %v1257
  %1967 = vmatpush.bf16.msra.mxu0 %v1255
  %1968 = vmatpush.bf16.msra.mxu0 %v1253
  %1969 = vmatpush.bf16.msra.mxu0 %v1251
  %1970 = vmatpush.bf16.msra.mxu0 %v1249
  %1971 = vmatpush.bf16.msra.mxu0 %v1247
  %1972 = vmatpush.bf16.msra.mxu0 %v1245
  %1973 = vmatpush.bf16.msra.mxu0 %v1243
  %1974 = vmatmul.bf16.gmra.mxu0 %v352
  %v1975 = vpop.f32.mrf.mxu0
  %v1976 = vadd.f32 %v1962, %v1975
  %v1977 = vpop.f32.mrf.mxu0
  %v1978 = vadd.f32 %v1964, %v1977
  %1979 = vdwg.mxu0
  %1980 = vmatpush.bf16.msra.mxu0 %v1273
  %1981 = vmatpush.bf16.msra.mxu0 %v1271
  %1982 = vmatpush.bf16.msra.mxu0 %v1269
  %1983 = vmatpush.bf16.msra.mxu0 %v1267
  %1984 = vmatpush.bf16.msra.mxu0 %v1265
  %1985 = vmatpush.bf16.msra.mxu0 %v1263
  %1986 = vmatpush.bf16.msra.mxu0 %v1261
  %1987 = vmatpush.bf16.msra.mxu0 %v1259
  %1988 = vmatmul.bf16.gmra.mxu0 %v353
  %v1989 = vpop.f32.mrf.mxu0
  %v1990 = vadd.f32 %v1976, %v1989
  %v1991 = vpop.f32.mrf.mxu0
  %v1992 = vadd.f32 %v1978, %v1991
  %1993 = vdwg.mxu0
  %1994 = vmatpush.bf16.msra.mxu0 %v1289
  %1995 = vmatpush.bf16.msra.mxu0 %v1287
  %1996 = vmatpush.bf16.msra.mxu0 %v1285
  %1997 = vmatpush.bf16.msra.mxu0 %v1283
  %1998 = vmatpush.bf16.msra.mxu0 %v1281
  %1999 = vmatpush.bf16.msra.mxu0 %v1279
  %2000 = vmatpush.bf16.msra.mxu0 %v1277
  %2001 = vmatpush.bf16.msra.mxu0 %v1275
  %2002 = vmatmul.bf16.gmra.mxu0 %v354
  %v2003 = vpop.f32.mrf.mxu0
  %v2004 = vadd.f32 %v1990, %v2003
  %v2005 = vpop.f32.mrf.mxu0
  %v2006 = vadd.f32 %v1992, %v2005
  %2007 = vdwg.mxu0
  %2008 = vmatpush.bf16.msra.mxu0 %v1305
  %2009 = vmatpush.bf16.msra.mxu0 %v1303
  %2010 = vmatpush.bf16.msra.mxu0 %v1301
  %2011 = vmatpush.bf16.msra.mxu0 %v1299
  %2012 = vmatpush.bf16.msra.mxu0 %v1297
  %2013 = vmatpush.bf16.msra.mxu0 %v1295
  %2014 = vmatpush.bf16.msra.mxu0 %v1293
  %2015 = vmatpush.bf16.msra.mxu0 %v1291
  %2016 = vmatmul.bf16.gmra.mxu0 %v355
  %v2017 = vpop.f32.mrf.mxu0
  %v2018 = vadd.f32 %v2004, %v2017
  %v2019 = vpop.f32.mrf.mxu0
  %v2020 = vadd.f32 %v2006, %v2019
  %2021 = vdwg.mxu0
  %2022 = vmatpush.bf16.msra.mxu0 %v1321
  %2023 = vmatpush.bf16.msra.mxu0 %v1319
  %2024 = vmatpush.bf16.msra.mxu0 %v1317
  %2025 = vmatpush.bf16.msra.mxu0 %v1315
  %2026 = vmatpush.bf16.msra.mxu0 %v1313
  %2027 = vmatpush.bf16.msra.mxu0 %v1311
  %2028 = vmatpush.bf16.msra.mxu0 %v1309
  %2029 = vmatpush.bf16.msra.mxu0 %v1307
  %2030 = vmatmul.bf16.gmra.mxu0 %v356
  %v2031 = vpop.f32.mrf.mxu0
  %v2032 = vadd.f32 %v2018, %v2031
  %v2033 = vpop.f32.mrf.mxu0
  %v2034 = vadd.f32 %v2020, %v2033
  %2035 = vdwg.mxu0
  %2036 = vmatpush.bf16.msra.mxu0 %v1337
  %2037 = vmatpush.bf16.msra.mxu0 %v1335
  %2038 = vmatpush.bf16.msra.mxu0 %v1333
  %2039 = vmatpush.bf16.msra.mxu0 %v1331
  %2040 = vmatpush.bf16.msra.mxu0 %v1329
  %2041 = vmatpush.bf16.msra.mxu0 %v1327
  %2042 = vmatpush.bf16.msra.mxu0 %v1325
  %2043 = vmatpush.bf16.msra.mxu0 %v1323
  %2044 = vmatmul.bf16.gmra.mxu0 %v357
  %v2045 = vpop.f32.mrf.mxu0
  %v2046 = vadd.f32 %v2032, %v2045
  %v2047 = vpop.f32.mrf.mxu0
  %v2048 = vadd.f32 %v2034, %v2047
  %2049 = vdwg.mxu0
  %2050 = vmatpush.bf16.msra.mxu0 %v1353
  %2051 = vmatpush.bf16.msra.mxu0 %v1351
  %2052 = vmatpush.bf16.msra.mxu0 %v1349
  %2053 = vmatpush.bf16.msra.mxu0 %v1347
  %2054 = vmatpush.bf16.msra.mxu0 %v1345
  %2055 = vmatpush.bf16.msra.mxu0 %v1343
  %2056 = vmatpush.bf16.msra.mxu0 %v1341
  %2057 = vmatpush.bf16.msra.mxu0 %v1339
  %2058 = vmatmul.bf16.gmra.mxu0 %v358
  %v2059 = vpop.f32.mrf.mxu0
  %v2060 = vadd.f32 %v2046, %v2059
  %v2061 = vpop.f32.mrf.mxu0
  %v2062 = vadd.f32 %v2048, %v2061
  %2063 = vdwg.mxu0
  %2064 = vmatpush.bf16.msra.mxu0 %v1369
  %2065 = vmatpush.bf16.msra.mxu0 %v1367
  %2066 = vmatpush.bf16.msra.mxu0 %v1365
  %2067 = vmatpush.bf16.msra.mxu0 %v1363
  %2068 = vmatpush.bf16.msra.mxu0 %v1361
  %2069 = vmatpush.bf16.msra.mxu0 %v1359
  %2070 = vmatpush.bf16.msra.mxu0 %v1357
  %2071 = vmatpush.bf16.msra.mxu0 %v1355
  %2072 = vmatmul.bf16.gmra.mxu0 %v359
  %v2073 = vpop.f32.mrf.mxu0
  %v2074 = vadd.f32 %v2060, %v2073
  %v2075 = vpop.f32.mrf.mxu0
  %v2076 = vadd.f32 %v2062, %v2075
  %2077 = vdwg.mxu0
  %2078 = vmatpush.bf16.msra.mxu0 %v1385
  %2079 = vmatpush.bf16.msra.mxu0 %v1383
  %2080 = vmatpush.bf16.msra.mxu0 %v1381
  %2081 = vmatpush.bf16.msra.mxu0 %v1379
  %2082 = vmatpush.bf16.msra.mxu0 %v1377
  %2083 = vmatpush.bf16.msra.mxu0 %v1375
  %2084 = vmatpush.bf16.msra.mxu0 %v1373
  %2085 = vmatpush.bf16.msra.mxu0 %v1371
  %2086 = vmatmul.bf16.gmra.mxu0 %v360
  %v2087 = vpop.f32.mrf.mxu0
  %v2088 = vadd.f32 %v2074, %v2087
  %v2089 = vpop.f32.mrf.mxu0
  %v2090 = vadd.f32 %v2076, %v2089
  %2091 = vdwg.mxu0
  %2092 = vmatpush.bf16.msra.mxu0 %v1401
  %2093 = vmatpush.bf16.msra.mxu0 %v1399
  %2094 = vmatpush.bf16.msra.mxu0 %v1397
  %2095 = vmatpush.bf16.msra.mxu0 %v1395
  %2096 = vmatpush.bf16.msra.mxu0 %v1393
  %2097 = vmatpush.bf16.msra.mxu0 %v1391
  %2098 = vmatpush.bf16.msra.mxu0 %v1389
  %2099 = vmatpush.bf16.msra.mxu0 %v1387
  %2100 = vmatmul.bf16.gmra.mxu0 %v361
  %v2101 = vpop.f32.mrf.mxu0
  %v2102 = vadd.f32 %v2088, %v2101
  %v2103 = vpop.f32.mrf.mxu0
  %v2104 = vadd.f32 %v2090, %v2103
  %2105 = vdwg.mxu0
  %v2106 = vmax.f32 %v1878, 0.0
  %v2107 = vmax.f32 %v2102, 0.0
  %v2108 = vmax.f32 %v1880, 0.0
  %v2109 = vmax.f32 %v2104, 0.0
  %v2110 = vpack.c.bf16 %v2108, %v2106
  %v2111 = vpack.c.bf16 %v2109, %v2107
  %v2112 = vld [vmem:[%s3] sm:$0xf]
  %v2113 = vld [vmem:[%s3 + $0x4] sm:$0xf]
  %v2114 = vld [vmem:[%s3 + $0x8] sm:$0xf]
  %v2115 = vld [vmem:[%s3 + $0xc] sm:$0xf]
  %v2116 = vld [vmem:[%s3 + $0x10] sm:$0xf]
  %v2117 = vld [vmem:[%s3 + $0x14] sm:$0xf]
  %v2118 = vld [vmem:[%s3 + $0x18] sm:$0xf]
  %v2119 = vld [vmem:[%s3 + $0x1c] sm:$0xf]
  %v2120 = vld [vmem:[%s3 + $0x20] sm:$0xf]
  %v2121 = vld [vmem:[%s3 + $0x24] sm:$0xf]
  %v2122 = vld [vmem:[%s3 + $0x28] sm:$0xf]
  %v2123 = vld [vmem:[%s3 + $0x2c] sm:$0xf]
  %v2124 = vld [vmem:[%s3 + $0x30] sm:$0xf]
  %v2125 = vld [vmem:[%s3 + $0x34] sm:$0xf]
  %v2126 = vld [vmem:[%s3 + $0x38] sm:$0xf]
  %v2127 = vld [vmem:[%s3 + $0x3c] sm:$0xf]
  %v2128 = vld [vmem:[%s3 + $0x40] sm:$0xf]
  %v2129 = vld [vmem:[%s3 + $0x44] sm:$0xf]
  %v2130 = vld [vmem:[%s3 + $0x48] sm:$0xf]
  %v2131 = vld [vmem:[%s3 + $0x4c] sm:$0xf]
  %v2132 = vld [vmem:[%s3 + $0x50] sm:$0xf]
  %v2133 = vld [vmem:[%s3 + $0x54] sm:$0xf]
  %v2134 = vld [vmem:[%s3 + $0x58] sm:$0xf]
  %v2135 = vld [vmem:[%s3 + $0x5c] sm:$0xf]
  %v2136 = vld [vmem:[%s3 + $0x60] sm:$0xf]
  %v2137 = vld [vmem:[%s3 + $0x64] sm:$0xf]
  %v2138 = vld [vmem:[%s3 + $0x68] sm:$0xf]
  %v2139 = vld [vmem:[%s3 + $0x6c] sm:$0xf]
  %v2140 = vld [vmem:[%s3 + $0x70] sm:$0xf]
  %v2141 = vld [vmem:[%s3 + $0x74] sm:$0xf]
  %v2142 = vld [vmem:[%s3 + $0x78] sm:$0xf]
  %v2143 = vld [vmem:[%s3 + $0x7c] sm:$0xf]
  %v2144 = vld [vmem:[%s4] sm:$0x1]
  %v2146 = vperm.slane %v2144, 0
  %v2180 = vunpack.c.l.b16 %v2112
  %v2181 = vunpack.c.l.b16 %v2113
  %v2182 = vunpack.c.l.b16 %v2114
  %v2183 = vunpack.c.l.b16 %v2115
  %v2184 = vunpack.c.l.b16 %v2116
  %v2185 = vunpack.c.l.b16 %v2117
  %v2186 = vunpack.c.l.b16 %v2118
  %v2187 = vunpack.c.l.b16 %v2119
  %v2188 = vunpack.c.l.b16 %v2120
  %v2189 = vunpack.c.l.b16 %v2121
  %v2190 = vunpack.c.l.b16 %v2122
  %v2191 = vunpack.c.l.b16 %v2123
  %v2192 = vunpack.c.l.b16 %v2124
  %v2193 = vunpack.c.l.b16 %v2125
  %v2194 = vunpack.c.l.b16 %v2126
  %v2195 = vunpack.c.l.b16 %v2127
  %v2196 = vunpack.c.l.b16 %v2128
  %v2197 = vunpack.c.l.b16 %v2129
  %v2198 = vunpack.c.l.b16 %v2130
  %v2199 = vunpack.c.l.b16 %v2131
  %v2200 = vunpack.c.l.b16 %v2132
  %v2201 = vunpack.c.l.b16 %v2133
  %v2202 = vunpack.c.l.b16 %v2134
  %v2203 = vunpack.c.l.b16 %v2135
  %v2204 = vunpack.c.l.b16 %v2136
  %v2205 = vunpack.c.l.b16 %v2137
  %v2206 = vunpack.c.l.b16 %v2138
  %v2207 = vunpack.c.l.b16 %v2139
  %v2208 = vunpack.c.l.b16 %v2140
  %v2209 = vunpack.c.l.b16 %v2141
  %v2210 = vunpack.c.l.b16 %v2142
  %v2211 = vunpack.c.l.b16 %v2143
  %v2212 = vpack.c.b16 %v2181, %v2180
  %v2213 = vpack.c.b16 %v2183, %v2182
  %v2214 = vpack.c.b16 %v2185, %v2184
  %v2215 = vpack.c.b16 %v2187, %v2186
  %v2216 = vpack.c.b16 %v2189, %v2188
  %v2217 = vpack.c.b16 %v2191, %v2190
  %v2218 = vpack.c.b16 %v2193, %v2192
  %v2219 = vpack.c.b16 %v2195, %v2194
  %v2220 = vpack.c.b16 %v2197, %v2196
  %v2221 = vpack.c.b16 %v2199, %v2198
  %v2222 = vpack.c.b16 %v2201, %v2200
  %v2223 = vpack.c.b16 %v2203, %v2202
  %v2224 = vpack.c.b16 %v2205, %v2204
  %v2225 = vpack.c.b16 %v2207, %v2206
  %v2226 = vpack.c.b16 %v2209, %v2208
  %v2227 = vpack.c.b16 %v2211, %v2210
  %2244 = vmatpush.bf16.msra.mxu0 %v2219
  %2245 = vmatpush.bf16.msra.mxu0 %v2218
  %2246 = vmatpush.bf16.msra.mxu0 %v2217
  %2247 = vmatpush.bf16.msra.mxu0 %v2216
  %2248 = vmatpush.bf16.msra.mxu0 %v2215
  %2249 = vmatpush.bf16.msra.mxu0 %v2214
  %2250 = vmatpush.bf16.msra.mxu0 %v2213
  %2251 = vmatpush.bf16.msra.mxu0 %v2212
  %2252 = vmatmul.bf16.gmra.mxu0 %v2110
  %v2253 = vpop.f32.mrf.mxu0
  %v2254 = vadd.f32 %v2146, %v2253
  %v2255 = vpop.f32.mrf.mxu0
  %v2256 = vadd.f32 %v2146, %v2255
  %2257 = vdwg.mxu0
  %2258 = vmatpush.bf16.msra.mxu0 %v2227
  %2259 = vmatpush.bf16.msra.mxu0 %v2226
  %2260 = vmatpush.bf16.msra.mxu0 %v2225
  %2261 = vmatpush.bf16.msra.mxu0 %v2224
  %2262 = vmatpush.bf16.msra.mxu0 %v2223
  %2263 = vmatpush.bf16.msra.mxu0 %v2222
  %2264 = vmatpush.bf16.msra.mxu0 %v2221
  %2265 = vmatpush.bf16.msra.mxu0 %v2220
  %2266 = vmatmul.bf16.gmra.mxu0 %v2111
  %v2267 = vpop.f32.mrf.mxu0
  %v2268 = vadd.f32 %v2254, %v2267
  %v2269 = vpop.f32.mrf.mxu0
  %v2270 = vadd.f32 %v2256, %v2269
  %2271 = vdwg.mxu0
  %2272 = vst [vmem:[%s5] sm:$0xff] %v2268
  %2273 = vst [vmem:[%s5 + $0x8] sm:$0xff] %v2270
  // Predicated region
  $region22: #{classifier_forward.1} parent=0 // pred_check
    _
  $region23: #{classifier_forward.1} parent=0 // pred_check_branch
    %2275 = sbr.rel (0) target = $region25
  $region24: #{classifier_forward.1} parent=0 // pred_region
    _
  $region25: #{classifier_forward.1} parent=0 // pred_fallthru
    _
  // Predicated region
  $region26: #{classifier_forward.1} parent=0 // pred_check
    _
  $region27: #{classifier_forward.1} parent=0 // pred_check_branch
    %2277 = sbr.rel (0) target = $region29
  $region28: #{classifier_forward.1} parent=0 // pred_region
    _
  $region29: #{classifier_forward.1} parent=0 // pred_fallthru
    _

</llo_original>
